<compile_context>
chip_gen: v5e
topology: v5e:2x2
jax: 0.10.0
libtpu: 0.0.40
codegen_flags: <defaults>
</compile_context>

<pallas_src>
import numpy as np
import jax
import jax.numpy as jnp
from jax import lax
from jax.experimental import pallas as pl
from jax.experimental.pallas import tpu as pltpu

# ---- model hyperparameters (MAGECActor.__init__) ----
NODE_FEATURES = 16
EDGE_FEATURES = 4
HIDDEN = 32
NUM_LAYERS = 2
MAX_NEIGHBORS = 8
HALF = HIDDEN // 2

# ---- demo graph sizes ----
BATCH = 32             # padded/blocked internally; 2 grid steps of 16 graphs each
NUM_NODES = 8          # nodes per graph
NUM_EDGES = 12
GRAPHS_PER_BLOCK = 16  # GB: GB*NUM_NODES = 128 rows per grid step


def magec_kernel(x_ref, a_ref, e_ref, mask_ref, ssum_ref,
                 w_in_ref, b_in_ref,
                 whs_ref, we_ref, bns_ref,
                 wj_ref, bj_ref,
                 w1_ref, b1_ref, w2_ref, b2_ref,
                 ws1t_ref, bs1_ref, ws2_ref, bs2_ref,
                 out_ref):
    f32 = jnp.float32
    L, H, _ = whs_ref.shape           # (num_layers, hidden, 2*hidden)

    x = x_ref[0]                      # [rows, F_node]    rows = GB * N
    a_bd = a_ref[0]                   # [rows, rows]      block-diag normalized adjacency
    e = e_ref[0]                      # [rows, F_edge]    mean incoming edge features

    # input projection
    h = jnp.dot(x, w_in_ref[...], preferred_element_type=f32) + b_in_ref[...]

    # GraphSAGE-with-edge-features layers (mean aggregation, dense block-diag form)
    layer_outs = []
    for l in range(L):
        hw = jnp.dot(h, whs_ref[l], preferred_element_type=f32)      # fused [Wh || Ws]
        agg = jnp.dot(a_bd, hw[:, :H], preferred_element_type=f32)   # neighbor mean (incl. self loop)
        out = (agg
               + jnp.dot(e, we_ref[l], preferred_element_type=f32)   # edge-feature part
               + hw[:, H:]                                           # lin_self
               + bns_ref[l])
        # F.normalize(p=2, dim=-1), eps=1e-12  ->  x * rsqrt(max(|x|^2, 1e-24))
        sq = jnp.sum(out * out, axis=-1, keepdims=True)
        out = out * lax.rsqrt(jnp.maximum(sq, 1e-24))
        h = jnp.maximum(out, 0.0)                                    # ReLU (dropout = identity)
        layer_outs.append(h)

    # jump connection: one matmul over the concatenated layer outputs
    hcat = jnp.concatenate(layer_outs, axis=-1)                      # [rows, L*H]
    h = jnp.dot(hcat, wj_ref[...], preferred_element_type=f32) + bj_ref[...]

    # neighbor scorer: per-node MLP -> scalar score; [HF,1] matmul replaced by VPU reduce
    t = jnp.maximum(jnp.dot(h, w1_ref[...], preferred_element_type=f32) + b1_ref[...], 0.0)
    s = jnp.sum(t * w2_ref[...], axis=-1, keepdims=True) + b2_ref[...]   # [rows, 1]

    # mask: node index >= num_nodes, padded graphs, or == agent_idx  -> -10.0
    s = jnp.where(mask_ref[0] > 0.5, s, -10.0)                           # [rows, 1]

    # action selector (row-dense form). Regrouping rows per graph is folded into a
    # single graph-sum matmul:  u[g,:] = relu( sum_i scores[g,i] * ws1[i,:] + bs1 )
    u = jnp.dot(ssum_ref[...], s * ws1t_ref[...], preferred_element_type=f32) + bs1_ref[...]
    u = jnp.maximum(u, 0.0)                                              # [GB, HF]
    out_ref[0] = jnp.dot(u, ws2_ref[...], preferred_element_type=f32) + bs2_ref[...]  # [GB, MN]


def magec_forward(params, x, a_norm, e_mean, agent_idx, num_nodes,
                  graphs_per_block=GRAPHS_PER_BLOCK):
    B, N, NF = x.shape
    GB = graphs_per_block
    B_pad = ((B + GB - 1) // GB) * GB
    num_blocks = B_pad // GB
    pad = B_pad - B
    if pad:
        x = jnp.pad(x, ((0, pad), (0, 0), (0, 0)))
        a_norm = jnp.pad(a_norm, ((0, pad), (0, 0), (0, 0)))
        e_mean = jnp.pad(e_mean, ((0, pad), (0, 0), (0, 0)))
        agent_idx = jnp.pad(agent_idx, (0, pad))
        num_nodes = jnp.pad(num_nodes, (0, pad))
    R = GB * N

    # --- JAX glue (cheap preprocessing, no compute hoisted out of the model) ---
    x_blk = x.reshape(num_blocks, R, NF)
    e_blk = e_mean.reshape(num_blocks, R, EDGE_FEATURES)

    # block-diagonal normalized adjacency for each block of GB graphs
    a4 = a_norm.reshape(num_blocks, GB, N, N)
    eye_gb = jnp.eye(GB, dtype=a_norm.dtype)
    a_blk = jnp.einsum('gbij,bc->gbicj', a4, eye_gb).reshape(num_blocks, R, R)

    # per-row validity mask (node index within graph: < min(num_nodes, MN) and != agent)
    agent_c = jnp.minimum(agent_idx, jnp.maximum(num_nodes - 1, 0))
    node_i = jnp.arange(N)[None, :]
    valid = ((node_i < jnp.minimum(num_nodes, MAX_NEIGHBORS)[:, None])
             & (node_i != agent_c[:, None]))                 # [B_pad, N]
    mask_blk = valid.astype(jnp.float32).reshape(num_blocks, R, 1)

    # graph-sum matrix: [GB, R], row g sums rows of graph g
    s_sum = jnp.repeat(jnp.eye(GB, dtype=jnp.float32), N, axis=1)

    # selector first-layer weights replicated per graph over the stacked rows
    k = min(N, MAX_NEIGHBORS)
    ws1_pad = jnp.zeros((N, HALF), jnp.float32).at[:k].set(params['ws1'][:k])
    ws1_tiled = jnp.tile(ws1_pad, (GB, 1))                    # [R, HF]
    bs1_eff = params['bs1']
    if N < MAX_NEIGHBORS:
        # neighbor slots >= N contribute constant -10 * ws1 rows
        bs1_eff = bs1_eff + (-10.0) * jnp.sum(params['ws1'][N:], axis=0, keepdims=True)

    # --- BlockSpecs ---
    def full(arr):
        nd = arr.ndim
        return pl.BlockSpec(arr.shape, lambda g: (0,) * nd)   # constant index: resident weights

    def per_block(shape):
        nd = len(shape)
        return pl.BlockSpec((1,) + tuple(shape), lambda g: (g,) + (0,) * nd)

    in_specs = [
        per_block((R, NODE_FEATURES)),
        per_block((R, R)),
        per_block((R, EDGE_FEATURES)),
        per_block((R, 1)),
        full(s_sum),
        full(params['w_in']), full(params['b_in']),
        full(params['whs']), full(params['we']), full(params['bns']),
        full(params['wj']), full(params['bj']),
        full(params['w1']), full(params['b1']), full(params['w2']), full(params['b2']),
        full(ws1_tiled), full(bs1_eff), full(params['ws2']), full(params['bs2']),
    ]
    out_spec = pl.BlockSpec((1, GB, MAX_NEIGHBORS), lambda g: (g, 0, 0))

    grid_spec = pltpu.PrefetchScalarGridSpec(
        num_scalar_prefetch=0, grid=(num_blocks,),
        in_specs=in_specs, out_specs=out_spec)

    out = pl.pallas_call(
        magec_kernel,
        out_shape=jax.ShapeDtypeStruct((num_blocks, GB, MAX_NEIGHBORS), jnp.float32),
        grid_spec=grid_spec,
        compiler_params=pltpu.CompilerParams(dimension_semantics=("parallel",)),
    )(x_blk, a_blk, e_blk, mask_blk, s_sum,
      params['w_in'], params['b_in'],
      params['whs'], params['we'], params['bns'],
      params['wj'], params['bj'],
      params['w1'], params['b1'], params['w2'], params['b2'],
      ws1_tiled, bs1_eff, params['ws2'], params['bs2'])

    return out.reshape(B_pad, MAX_NEIGHBORS)[:B]    # lane-dense [B, MN]


# ------------------------- deterministic parameter init -------------------------
def init_params(key):
    keys = jax.random.split(key, 9)

    def xav(k, shape, fan_in, fan_out, gain=0.1):
        lim = gain * float(np.sqrt(6.0 / (fan_in + fan_out)))
        return jax.random.uniform(k, shape, jnp.float32, -lim, lim)

    H, HF, NF, EF, L, MN = HIDDEN, HALF, NODE_FEATURES, EDGE_FEATURES, NUM_LAYERS, MAX_NEIGHBORS
    wh = xav(keys[1], (L, H, H), H + EF, H)     # lin_neighbor (node part), right-multiply layout
    ws = xav(keys[3], (L, H, H), H, H)          # lin_self, right-multiply layout
    return dict(
        w_in=xav(keys[0], (NF, H), NF, H),
        b_in=jnp.zeros((1, H), jnp.float32),
        whs=jnp.concatenate([wh, ws], axis=-1),         # fused [Wh || Ws], (L, H, 2H)
        we=xav(keys[2], (L, EF, H), H + EF, H),         # lin_neighbor (edge part)
        bns=jnp.zeros((L, 1, H), jnp.float32),          # = b_neighbor + b_self (both zero-init)
        wj=xav(keys[4], (L * H, H), L * H, H),          # jump_connection weight.T
        bj=jnp.zeros((1, H), jnp.float32),
        # neighbor_scorer
        w1=xav(keys[5], (H, HF), H, HF),
        b1=jnp.zeros((1, HF), jnp.float32),
        w2=xav(keys[6], (1, HF), HF, 1),                # kept as a row; applied as a reduction
        b2=jnp.zeros((1, 1), jnp.float32),
        # action_selector (right-multiply layout = PyTorch weight.T)
        ws1=xav(keys[7], (MN, HF), MN, HF),
        bs1=jnp.zeros((1, HF), jnp.float32),
        ws2=xav(keys[8], (HF, MN), HF, MN),
        bs2=jnp.zeros((1, MN), jnp.float32),
    )


# -------- JAX glue: edge_index/edge_attr -> dense normalized adjacency ----------
def build_dense_graph(key, n_nodes, n_edges):
    k1, k2, k3 = jax.random.split(key, 3)
    src = jax.random.randint(k1, (n_edges,), 0, n_nodes)
    tgt = jax.random.randint(k2, (n_edges,), 0, n_nodes)
    edge_attr = jax.random.normal(k3, (n_edges, EDGE_FEATURES), jnp.float32)
    # A[i, j] = #edges j -> i, plus self loops (add_self_loops, fill_value=0.0)
    A = jnp.zeros((n_nodes, n_nodes), jnp.float32).at[tgt, src].add(1.0)
    A = A + jnp.eye(n_nodes, dtype=jnp.float32)
    deg = jnp.sum(A, axis=1, keepdims=True)
    e_sum = jnp.zeros((n_nodes, EDGE_FEATURES), jnp.float32).at[tgt].add(edge_attr)
    return A / deg, e_sum / deg


# ----------------------------- pure-JAX reference --------------------------------
def reference_forward(params, x, a_norm, e_mean, agent_idx, num_nodes):
    P = lax.Precision.HIGHEST
    H = HIDDEN
    outs = []
    for b in range(x.shape[0]):
        xb, ab, eb = x[b], a_norm[b], e_mean[b]
        h = jnp.dot(xb, params['w_in'], precision=P) + params['b_in']
        layer_outs = []
        for l in range(NUM_LAYERS):
            wh = params['whs'][l][:, :H]
            ws = params['whs'][l][:, H:]
            agg = jnp.dot(ab, jnp.dot(h, wh, precision=P), precision=P)
            agg = agg + jnp.dot(eb, params['we'][l], precision=P)
            out = agg + jnp.dot(h, ws, precision=P) + params['bns'][l]
            nrm = jnp.sqrt(jnp.sum(out * out, axis=-1, keepdims=True))
            out = out / jnp.maximum(nrm, 1e-12)
            h = jnp.maximum(out, 0.0)
            layer_outs.append(h)
        hcat = jnp.concatenate(layer_outs, axis=-1)
        h = jnp.dot(hcat, params['wj'], precision=P) + params['bj']
        t = jnp.maximum(jnp.dot(h, params['w1'], precision=P) + params['b1'], 0.0)
        s = jnp.dot(t, params['w2'].T, precision=P) + params['b2']   # [N, 1]
        n_b = num_nodes[b]
        agent = jnp.minimum(agent_idx[b], jnp.maximum(n_b - 1, 0))
        idx = jnp.arange(MAX_NEIGHBORS)
        k = min(x.shape[1], MAX_NEIGHBORS)
        s_full = jnp.full((MAX_NEIGHBORS,), -10.0, jnp.float32)
        valid = (idx[:k] < n_b) & (idx[:k] != agent)
        s_full = s_full.at[:k].set(jnp.where(valid, s[:k, 0], -10.0))
        scores = s_full[None, :]
        u = jnp.maximum(jnp.dot(scores, params['ws1'], precision=P) + params['bs1'], 0.0)
        logits = jnp.dot(u, params['ws2'], precision=P) + params['bs2']
        outs.append(logits[0])
    return jnp.stack(outs)


if __name__ == "__main__":
    key = jax.random.PRNGKey(0)
    kp, kx, kg, ka = jax.random.split(key, 4)

    params = init_params(kp)
    x = jax.random.normal(kx, (BATCH, NUM_NODES, NODE_FEATURES), jnp.float32)
    gkeys = jax.random.split(kg, BATCH)
    graphs = [build_dense_graph(gkeys[b], NUM_NODES, NUM_EDGES) for b in range(BATCH)]
    a_norm = jnp.stack([g[0] for g in graphs])
    e_mean = jnp.stack([g[1] for g in graphs])
    agent_idx = jax.random.randint(ka, (BATCH,), 0, NUM_NODES).astype(jnp.int32)
    num_nodes = jnp.full((BATCH,), NUM_NODES, dtype=jnp.int32)

    out = magec_forward(params, x, a_norm, e_mean, agent_idx, num_nodes)
    out = jax.block_until_ready(out)

    ref = reference_forward(params, x, a_norm, e_mean, agent_idx, num_nodes)
    np.testing.assert_allclose(np.asarray(out), np.asarray(ref), rtol=2e-2, atol=2e-3)
    print("KERNEL_OK")
</pallas_src>

<mosaic_0001>
module attributes {stable_mosaic.version = 11 : i64} {
  func.func @magec_kernel(%arg0: i32, %arg1: memref<1x128x16xf32, #tpu.memory_space<vmem>>, %arg2: memref<1x128x128xf32, #tpu.memory_space<vmem>>, %arg3: memref<1x128x4xf32, #tpu.memory_space<vmem>>, %arg4: memref<1x128x1xf32, #tpu.memory_space<vmem>>, %arg5: memref<16x128xf32, #tpu.memory_space<vmem>>, %arg6: memref<16x32xf32, #tpu.memory_space<vmem>>, %arg7: memref<1x32xf32, #tpu.memory_space<vmem>>, %arg8: memref<2x32x64xf32, #tpu.memory_space<vmem>>, %arg9: memref<2x4x32xf32, #tpu.memory_space<vmem>>, %arg10: memref<2x1x32xf32, #tpu.memory_space<vmem>>, %arg11: memref<64x32xf32, #tpu.memory_space<vmem>>, %arg12: memref<1x32xf32, #tpu.memory_space<vmem>>, %arg13: memref<32x16xf32, #tpu.memory_space<vmem>>, %arg14: memref<1x16xf32, #tpu.memory_space<vmem>>, %arg15: memref<1x16xf32, #tpu.memory_space<vmem>>, %arg16: memref<1x1xf32, #tpu.memory_space<vmem>>, %arg17: memref<128x16xf32, #tpu.memory_space<vmem>>, %arg18: memref<1x16xf32, #tpu.memory_space<vmem>>, %arg19: memref<16x8xf32, #tpu.memory_space<vmem>>, %arg20: memref<1x8xf32, #tpu.memory_space<vmem>>, %arg21: memref<1x16x8xf32, #tpu.memory_space<vmem>>) attributes {dimension_semantics = [#tpu.dimension_semantics<parallel>], iteration_bounds = array<i64: 2>, scalar_prefetch = 0 : i64, scratch_operands = 0 : i64, tpu.core_type = #tpu.core_type<tc>, window_params = [{transform_indices = @transform_0, window_bounds = array<i64: 1, 128, 16>}, {transform_indices = @transform_1, window_bounds = array<i64: 1, 128, 128>}, {transform_indices = @transform_2, window_bounds = array<i64: 1, 128, 4>}, {transform_indices = @transform_3, window_bounds = array<i64: 1, 128, 1>}, {pipeline_mode = #tpu.pipeline_mode<synchronous>, transform_indices = @transform_4, window_bounds = array<i64: 16, 128>}, {pipeline_mode = #tpu.pipeline_mode<synchronous>, transform_indices = @transform_5, window_bounds = array<i64: 16, 32>}, {pipeline_mode = #tpu.pipeline_mode<synchronous>, transform_indices = @transform_6, window_bounds = array<i64: 1, 32>}, {pipeline_mode = #tpu.pipeline_mode<synchronous>, transform_indices = @transform_7, window_bounds = array<i64: 2, 32, 64>}, {pipeline_mode = #tpu.pipeline_mode<synchronous>, transform_indices = @transform_8, window_bounds = array<i64: 2, 4, 32>}, {pipeline_mode = #tpu.pipeline_mode<synchronous>, transform_indices = @transform_9, window_bounds = array<i64: 2, 1, 32>}, {pipeline_mode = #tpu.pipeline_mode<synchronous>, transform_indices = @transform_10, window_bounds = array<i64: 64, 32>}, {pipeline_mode = #tpu.pipeline_mode<synchronous>, transform_indices = @transform_11, window_bounds = array<i64: 1, 32>}, {pipeline_mode = #tpu.pipeline_mode<synchronous>, transform_indices = @transform_12, window_bounds = array<i64: 32, 16>}, {pipeline_mode = #tpu.pipeline_mode<synchronous>, transform_indices = @transform_13, window_bounds = array<i64: 1, 16>}, {pipeline_mode = #tpu.pipeline_mode<synchronous>, transform_indices = @transform_14, window_bounds = array<i64: 1, 16>}, {pipeline_mode = #tpu.pipeline_mode<synchronous>, transform_indices = @transform_15, window_bounds = array<i64: 1, 1>}, {pipeline_mode = #tpu.pipeline_mode<synchronous>, transform_indices = @transform_16, window_bounds = array<i64: 128, 16>}, {pipeline_mode = #tpu.pipeline_mode<synchronous>, transform_indices = @transform_17, window_bounds = array<i64: 1, 16>}, {pipeline_mode = #tpu.pipeline_mode<synchronous>, transform_indices = @transform_18, window_bounds = array<i64: 16, 8>}, {pipeline_mode = #tpu.pipeline_mode<synchronous>, transform_indices = @transform_19, window_bounds = array<i64: 1, 8>}, {transform_indices = @transform_20, window_bounds = array<i64: 1, 16, 8>}]} {
    %c0 = arith.constant 0 : index
    %c0_0 = arith.constant 0 : index
    %c0_1 = arith.constant 0 : index
    %0 = vector.load %arg1[%c0, %c0_0, %c0_1] : memref<1x128x16xf32, #tpu.memory_space<vmem>>, vector<1x128x16xf32>
    %1 = vector.shape_cast %0 : vector<1x128x16xf32> to vector<128x16xf32>
    %c0_2 = arith.constant 0 : index
    %c0_3 = arith.constant 0 : index
    %c0_4 = arith.constant 0 : index
    %2 = vector.load %arg2[%c0_2, %c0_3, %c0_4] : memref<1x128x128xf32, #tpu.memory_space<vmem>>, vector<1x128x128xf32>
    %3 = vector.shape_cast %2 : vector<1x128x128xf32> to vector<128x128xf32>
    %c0_5 = arith.constant 0 : index
    %c0_6 = arith.constant 0 : index
    %c0_7 = arith.constant 0 : index
    %4 = vector.load %arg3[%c0_5, %c0_6, %c0_7] : memref<1x128x4xf32, #tpu.memory_space<vmem>>, vector<1x128x4xf32>
    %5 = vector.shape_cast %4 : vector<1x128x4xf32> to vector<128x4xf32>
    %c0_8 = arith.constant 0 : index
    %c0_9 = arith.constant 0 : index
    %6 = vector.load %arg6[%c0_8, %c0_9] : memref<16x32xf32, #tpu.memory_space<vmem>>, vector<16x32xf32>
    %cst = arith.constant dense<0.000000e+00> : vector<128x32xf32>
    %7 = tpu.matmul %1, %6, %cst {dimension_numbers = #tpu.dot_dimension_numbers<[1], [0], [0], [1], [0, 0, 1, 1], [], []>} : vector<128x16xf32>, vector<16x32xf32>, vector<128x32xf32> -> vector<128x32xf32>
    %c0_10 = arith.constant 0 : index
    %c0_11 = arith.constant 0 : index
    %8 = vector.load %arg7[%c0_10, %c0_11] : memref<1x32xf32, #tpu.memory_space<vmem>>, vector<1x32xf32>
    %9 = vector.broadcast %8 : vector<1x32xf32> to vector<128x32xf32>
    %10 = arith.addf %7, %9 : vector<128x32xf32>
    %c0_12 = arith.constant 0 : index
    %c0_13 = arith.constant 0 : index
    %c0_14 = arith.constant 0 : index
    %11 = vector.load %arg8[%c0_12, %c0_13, %c0_14] : memref<2x32x64xf32, #tpu.memory_space<vmem>>, vector<1x32x64xf32>
    %12 = vector.shape_cast %11 : vector<1x32x64xf32> to vector<32x64xf32>
    %cst_15 = arith.constant dense<0.000000e+00> : vector<128x64xf32>
    %13 = tpu.matmul %10, %12, %cst_15 {dimension_numbers = #tpu.dot_dimension_numbers<[1], [0], [0], [1], [0, 0, 1, 1], [], []>} : vector<128x32xf32>, vector<32x64xf32>, vector<128x64xf32> -> vector<128x64xf32>
    %14 = vector.extract_strided_slice %13 {offsets = [0, 0], sizes = [128, 32], strides = [1, 1]} : vector<128x64xf32> to vector<128x32xf32>
    %cst_16 = arith.constant dense<0.000000e+00> : vector<128x32xf32>
    %15 = tpu.matmul %3, %14, %cst_16 {dimension_numbers = #tpu.dot_dimension_numbers<[1], [0], [0], [1], [0, 0, 1, 1], [], []>} : vector<128x128xf32>, vector<128x32xf32>, vector<128x32xf32> -> vector<128x32xf32>
    %c0_17 = arith.constant 0 : index
    %c0_18 = arith.constant 0 : index
    %c0_19 = arith.constant 0 : index
    %16 = vector.load %arg9[%c0_17, %c0_18, %c0_19] : memref<2x4x32xf32, #tpu.memory_space<vmem>>, vector<1x4x32xf32>
    %17 = vector.shape_cast %16 : vector<1x4x32xf32> to vector<4x32xf32>
    %cst_20 = arith.constant dense<0.000000e+00> : vector<128x32xf32>
    %18 = tpu.matmul %5, %17, %cst_20 {dimension_numbers = #tpu.dot_dimension_numbers<[1], [0], [0], [1], [0, 0, 1, 1], [], []>} : vector<128x4xf32>, vector<4x32xf32>, vector<128x32xf32> -> vector<128x32xf32>
    %19 = arith.addf %15, %18 : vector<128x32xf32>
    %20 = vector.extract_strided_slice %13 {offsets = [0, 32], sizes = [128, 32], strides = [1, 1]} : vector<128x64xf32> to vector<128x32xf32>
    %21 = arith.addf %19, %20 : vector<128x32xf32>
    %c0_21 = arith.constant 0 : index
    %c0_22 = arith.constant 0 : index
    %c0_23 = arith.constant 0 : index
    %22 = vector.load %arg10[%c0_21, %c0_22, %c0_23] : memref<2x1x32xf32, #tpu.memory_space<vmem>>, vector<1x1x32xf32>
    %23 = vector.shape_cast %22 : vector<1x1x32xf32> to vector<1x32xf32>
    %24 = vector.broadcast %23 : vector<1x32xf32> to vector<128x32xf32>
    %25 = arith.addf %21, %24 : vector<128x32xf32>
    %26 = arith.mulf %25, %25 : vector<128x32xf32>
    %cst_24 = arith.constant dense<0.000000e+00> : vector<128xf32>
    %27 = vector.multi_reduction <add>, %26, %cst_24 [1] : vector<128x32xf32> to vector<128xf32>
    %28 = vector.shape_cast %27 : vector<128xf32> to vector<128x1xf32>
    %cst_25 = arith.constant 1.000000e-24 : f32
    %29 = vector.broadcast %cst_25 : f32 to vector<128x1xf32>
    %30 = arith.maximumf %28, %29 : vector<128x1xf32>
    %31 = math.rsqrt %30 : vector<128x1xf32>
    %32 = vector.broadcast %31 : vector<128x1xf32> to vector<128x32xf32>
    %33 = arith.mulf %25, %32 : vector<128x32xf32>
    %cst_26 = arith.constant 0.000000e+00 : f32
    %34 = vector.broadcast %cst_26 : f32 to vector<128x32xf32>
    %35 = arith.maximumf %33, %34 : vector<128x32xf32>
    %c1 = arith.constant 1 : index
    %c0_27 = arith.constant 0 : index
    %c0_28 = arith.constant 0 : index
    %36 = vector.load %arg8[%c1, %c0_27, %c0_28] : memref<2x32x64xf32, #tpu.memory_space<vmem>>, vector<1x32x64xf32>
    %37 = vector.shape_cast %36 : vector<1x32x64xf32> to vector<32x64xf32>
    %cst_29 = arith.constant dense<0.000000e+00> : vector<128x64xf32>
    %38 = tpu.matmul %35, %37, %cst_29 {dimension_numbers = #tpu.dot_dimension_numbers<[1], [0], [0], [1], [0, 0, 1, 1], [], []>} : vector<128x32xf32>, vector<32x64xf32>, vector<128x64xf32> -> vector<128x64xf32>
    %39 = vector.extract_strided_slice %38 {offsets = [0, 0], sizes = [128, 32], strides = [1, 1]} : vector<128x64xf32> to vector<128x32xf32>
    %cst_30 = arith.constant dense<0.000000e+00> : vector<128x32xf32>
    %40 = tpu.matmul %3, %39, %cst_30 {dimension_numbers = #tpu.dot_dimension_numbers<[1], [0], [0], [1], [0, 0, 1, 1], [], []>} : vector<128x128xf32>, vector<128x32xf32>, vector<128x32xf32> -> vector<128x32xf32>
    %c1_31 = arith.constant 1 : index
    %c0_32 = arith.constant 0 : index
    %c0_33 = arith.constant 0 : index
    %41 = vector.load %arg9[%c1_31, %c0_32, %c0_33] : memref<2x4x32xf32, #tpu.memory_space<vmem>>, vector<1x4x32xf32>
    %42 = vector.shape_cast %41 : vector<1x4x32xf32> to vector<4x32xf32>
    %cst_34 = arith.constant dense<0.000000e+00> : vector<128x32xf32>
    %43 = tpu.matmul %5, %42, %cst_34 {dimension_numbers = #tpu.dot_dimension_numbers<[1], [0], [0], [1], [0, 0, 1, 1], [], []>} : vector<128x4xf32>, vector<4x32xf32>, vector<128x32xf32> -> vector<128x32xf32>
    %44 = arith.addf %40, %43 : vector<128x32xf32>
    %45 = vector.extract_strided_slice %38 {offsets = [0, 32], sizes = [128, 32], strides = [1, 1]} : vector<128x64xf32> to vector<128x32xf32>
    %46 = arith.addf %44, %45 : vector<128x32xf32>
    %c1_35 = arith.constant 1 : index
    %c0_36 = arith.constant 0 : index
    %c0_37 = arith.constant 0 : index
    %47 = vector.load %arg10[%c1_35, %c0_36, %c0_37] : memref<2x1x32xf32, #tpu.memory_space<vmem>>, vector<1x1x32xf32>
    %48 = vector.shape_cast %47 : vector<1x1x32xf32> to vector<1x32xf32>
    %49 = vector.broadcast %48 : vector<1x32xf32> to vector<128x32xf32>
    %50 = arith.addf %46, %49 : vector<128x32xf32>
    %51 = arith.mulf %50, %50 : vector<128x32xf32>
    %cst_38 = arith.constant dense<0.000000e+00> : vector<128xf32>
    %52 = vector.multi_reduction <add>, %51, %cst_38 [1] : vector<128x32xf32> to vector<128xf32>
    %53 = vector.shape_cast %52 : vector<128xf32> to vector<128x1xf32>
    %cst_39 = arith.constant 1.000000e-24 : f32
    %54 = vector.broadcast %cst_39 : f32 to vector<128x1xf32>
    %55 = arith.maximumf %53, %54 : vector<128x1xf32>
    %56 = math.rsqrt %55 : vector<128x1xf32>
    %57 = vector.broadcast %56 : vector<128x1xf32> to vector<128x32xf32>
    %58 = arith.mulf %50, %57 : vector<128x32xf32>
    %cst_40 = arith.constant 0.000000e+00 : f32
    %59 = vector.broadcast %cst_40 : f32 to vector<128x32xf32>
    %60 = arith.maximumf %58, %59 : vector<128x32xf32>
    %61 = tpu.concatenate %35, %60 in 1 : vector<128x32xf32>, vector<128x32xf32> -> vector<128x64xf32>
    %c0_41 = arith.constant 0 : index
    %c0_42 = arith.constant 0 : index
    %62 = vector.load %arg11[%c0_41, %c0_42] : memref<64x32xf32, #tpu.memory_space<vmem>>, vector<64x32xf32>
    %cst_43 = arith.constant dense<0.000000e+00> : vector<128x32xf32>
    %63 = tpu.matmul %61, %62, %cst_43 {dimension_numbers = #tpu.dot_dimension_numbers<[1], [0], [0], [1], [0, 0, 1, 1], [], []>} : vector<128x64xf32>, vector<64x32xf32>, vector<128x32xf32> -> vector<128x32xf32>
    %c0_44 = arith.constant 0 : index
    %c0_45 = arith.constant 0 : index
    %64 = vector.load %arg12[%c0_44, %c0_45] : memref<1x32xf32, #tpu.memory_space<vmem>>, vector<1x32xf32>
    %65 = vector.broadcast %64 : vector<1x32xf32> to vector<128x32xf32>
    %66 = arith.addf %63, %65 : vector<128x32xf32>
    %c0_46 = arith.constant 0 : index
    %c0_47 = arith.constant 0 : index
    %67 = vector.load %arg13[%c0_46, %c0_47] : memref<32x16xf32, #tpu.memory_space<vmem>>, vector<32x16xf32>
    %cst_48 = arith.constant dense<0.000000e+00> : vector<128x16xf32>
    %68 = tpu.matmul %66, %67, %cst_48 {dimension_numbers = #tpu.dot_dimension_numbers<[1], [0], [0], [1], [0, 0, 1, 1], [], []>} : vector<128x32xf32>, vector<32x16xf32>, vector<128x16xf32> -> vector<128x16xf32>
    %c0_49 = arith.constant 0 : index
    %c0_50 = arith.constant 0 : index
    %69 = vector.load %arg14[%c0_49, %c0_50] : memref<1x16xf32, #tpu.memory_space<vmem>>, vector<1x16xf32>
    %70 = vector.broadcast %69 : vector<1x16xf32> to vector<128x16xf32>
    %71 = arith.addf %68, %70 : vector<128x16xf32>
    %cst_51 = arith.constant 0.000000e+00 : f32
    %72 = vector.broadcast %cst_51 : f32 to vector<128x16xf32>
    %73 = arith.maximumf %71, %72 : vector<128x16xf32>
    %c0_52 = arith.constant 0 : index
    %c0_53 = arith.constant 0 : index
    %74 = vector.load %arg15[%c0_52, %c0_53] : memref<1x16xf32, #tpu.memory_space<vmem>>, vector<1x16xf32>
    %75 = vector.broadcast %74 : vector<1x16xf32> to vector<128x16xf32>
    %76 = arith.mulf %73, %75 : vector<128x16xf32>
    %cst_54 = arith.constant dense<0.000000e+00> : vector<128xf32>
    %77 = vector.multi_reduction <add>, %76, %cst_54 [1] : vector<128x16xf32> to vector<128xf32>
    %78 = vector.shape_cast %77 : vector<128xf32> to vector<128x1xf32>
    %c0_55 = arith.constant 0 : index
    %c0_56 = arith.constant 0 : index
    %79 = vector.load %arg16[%c0_55, %c0_56] : memref<1x1xf32, #tpu.memory_space<vmem>>, vector<1x1xf32>
    %80 = vector.broadcast %79 : vector<1x1xf32> to vector<128x1xf32>
    %81 = arith.addf %78, %80 : vector<128x1xf32>
    %c0_57 = arith.constant 0 : index
    %c0_58 = arith.constant 0 : index
    %c0_59 = arith.constant 0 : index
    %82 = vector.load %arg4[%c0_57, %c0_58, %c0_59] : memref<1x128x1xf32, #tpu.memory_space<vmem>>, vector<1x128x1xf32>
    %83 = vector.shape_cast %82 : vector<1x128x1xf32> to vector<128x1xf32>
    %cst_60 = arith.constant 5.000000e-01 : f32
    %84 = vector.broadcast %cst_60 : f32 to vector<128x1xf32>
    %85 = arith.cmpf ogt, %83, %84 : vector<128x1xf32>
    %cst_61 = arith.constant -1.000000e+01 : f32
    %86 = vector.broadcast %cst_61 : f32 to vector<128x1xf32>
    %87 = arith.select %85, %81, %86 : vector<128x1xi1>, vector<128x1xf32>
    %c0_62 = arith.constant 0 : index
    %c0_63 = arith.constant 0 : index
    %88 = vector.load %arg5[%c0_62, %c0_63] : memref<16x128xf32, #tpu.memory_space<vmem>>, vector<16x128xf32>
    %c0_64 = arith.constant 0 : index
    %c0_65 = arith.constant 0 : index
    %89 = vector.load %arg17[%c0_64, %c0_65] : memref<128x16xf32, #tpu.memory_space<vmem>>, vector<128x16xf32>
    %90 = vector.broadcast %87 : vector<128x1xf32> to vector<128x16xf32>
    %91 = arith.mulf %90, %89 : vector<128x16xf32>
    %cst_66 = arith.constant dense<0.000000e+00> : vector<16x16xf32>
    %92 = tpu.matmul %88, %91, %cst_66 {dimension_numbers = #tpu.dot_dimension_numbers<[1], [0], [0], [1], [0, 0, 1, 1], [], []>} : vector<16x128xf32>, vector<128x16xf32>, vector<16x16xf32> -> vector<16x16xf32>
    %c0_67 = arith.constant 0 : index
    %c0_68 = arith.constant 0 : index
    %93 = vector.load %arg18[%c0_67, %c0_68] : memref<1x16xf32, #tpu.memory_space<vmem>>, vector<1x16xf32>
    %94 = vector.broadcast %93 : vector<1x16xf32> to vector<16x16xf32>
    %95 = arith.addf %92, %94 : vector<16x16xf32>
    %cst_69 = arith.constant 0.000000e+00 : f32
    %96 = vector.broadcast %cst_69 : f32 to vector<16x16xf32>
    %97 = arith.maximumf %95, %96 : vector<16x16xf32>
    %c0_70 = arith.constant 0 : index
    %c0_71 = arith.constant 0 : index
    %98 = vector.load %arg19[%c0_70, %c0_71] : memref<16x8xf32, #tpu.memory_space<vmem>>, vector<16x8xf32>
    %cst_72 = arith.constant dense<0.000000e+00> : vector<16x8xf32>
    %99 = tpu.matmul %97, %98, %cst_72 {dimension_numbers = #tpu.dot_dimension_numbers<[1], [0], [0], [1], [0, 0, 1, 1], [], []>} : vector<16x16xf32>, vector<16x8xf32>, vector<16x8xf32> -> vector<16x8xf32>
    %c0_73 = arith.constant 0 : index
    %c0_74 = arith.constant 0 : index
    %100 = vector.load %arg20[%c0_73, %c0_74] : memref<1x8xf32, #tpu.memory_space<vmem>>, vector<1x8xf32>
    %101 = vector.broadcast %100 : vector<1x8xf32> to vector<16x8xf32>
    %102 = arith.addf %99, %101 : vector<16x8xf32>
    %c0_75 = arith.constant 0 : index
    %c0_76 = arith.constant 0 : index
    %c0_77 = arith.constant 0 : index
    %103 = vector.load %arg21[%c0_75, %c0_76, %c0_77] : memref<1x16x8xf32, #tpu.memory_space<vmem>>, vector<1x16x8xf32>
    %104 = vector.shape_cast %103 : vector<1x16x8xf32> to vector<16x8xf32>
    %105 = vector.shape_cast %102 : vector<16x8xf32> to vector<1x16x8xf32>
    tpu.vector_store %arg21[%c0_75, %c0_76, %c0_77], %105 {strides = array<i32>} : memref<1x16x8xf32, #tpu.memory_space<vmem>>, vector<1x16x8xf32>,
    return
  }
  func.func @transform_0(%arg0: i32) -> (i32, i32, i32) {
    %c0_i32 = arith.constant 0 : i32
    %c0_i32_0 = arith.constant 0 : i32
    %c0_i32_1 = arith.constant 0 : i32
    return %arg0, %c0_i32, %c0_i32_0 : i32, i32, i32
  }
  func.func @transform_1(%arg0: i32) -> (i32, i32, i32) {
    %c0_i32 = arith.constant 0 : i32
    %c0_i32_0 = arith.constant 0 : i32
    %c0_i32_1 = arith.constant 0 : i32
    return %arg0, %c0_i32, %c0_i32_0 : i32, i32, i32
  }
  func.func @transform_2(%arg0: i32) -> (i32, i32, i32) {
    %c0_i32 = arith.constant 0 : i32
    %c0_i32_0 = arith.constant 0 : i32
    %c0_i32_1 = arith.constant 0 : i32
    return %arg0, %c0_i32, %c0_i32_0 : i32, i32, i32
  }
  func.func @transform_3(%arg0: i32) -> (i32, i32, i32) {
    %c0_i32 = arith.constant 0 : i32
    %c0_i32_0 = arith.constant 0 : i32
    %c0_i32_1 = arith.constant 0 : i32
    return %arg0, %c0_i32, %c0_i32_0 : i32, i32, i32
  }
  func.func @transform_4(%arg0: i32) -> (i32, i32) {
    %c0_i32 = arith.constant 0 : i32
    %c0_i32_0 = arith.constant 0 : i32
    %c0_i32_1 = arith.constant 0 : i32
    return %c0_i32, %c0_i32_0 : i32, i32
  }
  func.func @transform_5(%arg0: i32) -> (i32, i32) {
    %c0_i32 = arith.constant 0 : i32
    %c0_i32_0 = arith.constant 0 : i32
    %c0_i32_1 = arith.constant 0 : i32
    return %c0_i32, %c0_i32_0 : i32, i32
  }
  func.func @transform_6(%arg0: i32) -> (i32, i32) {
    %c0_i32 = arith.constant 0 : i32
    %c0_i32_0 = arith.constant 0 : i32
    %c0_i32_1 = arith.constant 0 : i32
    return %c0_i32, %c0_i32_0 : i32, i32
  }
  func.func @transform_7(%arg0: i32) -> (i32, i32, i32) {
    %c0_i32 = arith.constant 0 : i32
    %c0_i32_0 = arith.constant 0 : i32
    %c0_i32_1 = arith.constant 0 : i32
    %c0_i32_2 = arith.constant 0 : i32
    return %c0_i32, %c0_i32_0, %c0_i32_1 : i32, i32, i32
  }
  func.func @transform_8(%arg0: i32) -> (i32, i32, i32) {
    %c0_i32 = arith.constant 0 : i32
    %c0_i32_0 = arith.constant 0 : i32
    %c0_i32_1 = arith.constant 0 : i32
    %c0_i32_2 = arith.constant 0 : i32
    return %c0_i32, %c0_i32_0, %c0_i32_1 : i32, i32, i32
  }
  func.func @transform_9(%arg0: i32) -> (i32, i32, i32) {
    %c0_i32 = arith.constant 0 : i32
    %c0_i32_0 = arith.constant 0 : i32
    %c0_i32_1 = arith.constant 0 : i32
    %c0_i32_2 = arith.constant 0 : i32
    return %c0_i32, %c0_i32_0, %c0_i32_1 : i32, i32, i32
  }
  func.func @transform_10(%arg0: i32) -> (i32, i32) {
    %c0_i32 = arith.constant 0 : i32
    %c0_i32_0 = arith.constant 0 : i32
    %c0_i32_1 = arith.constant 0 : i32
    return %c0_i32, %c0_i32_0 : i32, i32
  }
  func.func @transform_11(%arg0: i32) -> (i32, i32) {
    %c0_i32 = arith.constant 0 : i32
    %c0_i32_0 = arith.constant 0 : i32
    %c0_i32_1 = arith.constant 0 : i32
    return %c0_i32, %c0_i32_0 : i32, i32
  }
  func.func @transform_12(%arg0: i32) -> (i32, i32) {
    %c0_i32 = arith.constant 0 : i32
    %c0_i32_0 = arith.constant 0 : i32
    %c0_i32_1 = arith.constant 0 : i32
    return %c0_i32, %c0_i32_0 : i32, i32
  }
  func.func @transform_13(%arg0: i32) -> (i32, i32) {
    %c0_i32 = arith.constant 0 : i32
    %c0_i32_0 = arith.constant 0 : i32
    %c0_i32_1 = arith.constant 0 : i32
    return %c0_i32, %c0_i32_0 : i32, i32
  }
  func.func @transform_14(%arg0: i32) -> (i32, i32) {
    %c0_i32 = arith.constant 0 : i32
    %c0_i32_0 = arith.constant 0 : i32
    %c0_i32_1 = arith.constant 0 : i32
    return %c0_i32, %c0_i32_0 : i32, i32
  }
  func.func @transform_15(%arg0: i32) -> (i32, i32) {
    %c0_i32 = arith.constant 0 : i32
    %c0_i32_0 = arith.constant 0 : i32
    %c0_i32_1 = arith.constant 0 : i32
    return %c0_i32, %c0_i32_0 : i32, i32
  }
  func.func @transform_16(%arg0: i32) -> (i32, i32) {
    %c0_i32 = arith.constant 0 : i32
    %c0_i32_0 = arith.constant 0 : i32
    %c0_i32_1 = arith.constant 0 : i32
    return %c0_i32, %c0_i32_0 : i32, i32
  }
  func.func @transform_17(%arg0: i32) -> (i32, i32) {
    %c0_i32 = arith.constant 0 : i32
    %c0_i32_0 = arith.constant 0 : i32
    %c0_i32_1 = arith.constant 0 : i32
    return %c0_i32, %c0_i32_0 : i32, i32
  }
  func.func @transform_18(%arg0: i32) -> (i32, i32) {
    %c0_i32 = arith.constant 0 : i32
    %c0_i32_0 = arith.constant 0 : i32
    %c0_i32_1 = arith.constant 0 : i32
    return %c0_i32, %c0_i32_0 : i32, i32
  }
  func.func @transform_19(%arg0: i32) -> (i32, i32) {
    %c0_i32 = arith.constant 0 : i32
    %c0_i32_0 = arith.constant 0 : i32
    %c0_i32_1 = arith.constant 0 : i32
    return %c0_i32, %c0_i32_0 : i32, i32
  }
  func.func @transform_20(%arg0: i32) -> (i32, i32, i32) {
    %c0_i32 = arith.constant 0 : i32
    %c0_i32_0 = arith.constant 0 : i32
    %c0_i32_1 = arith.constant 0 : i32
    return %arg0, %c0_i32, %c0_i32_0 : i32, i32, i32
  }
}

</mosaic_0001>

<llo_original>
// kernel: tpu_custom_call.1
$region0: #{tpu_custom_call.1}
  #allocation0 [shape = 'u32[]', space=smem, size = 0x4, offset = 0x4, fixed_abs, tag = 'smem constant byte address 0x4 - core index']
  #allocation1 [shape = 'u32[72,128]{1,0:T(1,128)}', space=vmem, size = 0x9000, scoped, tag = 'internal scratch']
  #allocation2 [shape = 'f32[1,1]{1,0:T(1,128)S(1)}', space=vmem, size = 0x200, scoped, tag = 'scoped memory for tpu_custom_call.1']
  %s0 = inlined_call_operand.vmem [shape: f32[2,128,16], index: 0, kind: input, shape index: {}]
  %s1 = inlined_call_operand.vmem [shape: f32[2,128,128], index: 1, kind: input, shape index: {}]
  %s2 = inlined_call_operand.vmem [shape: f32[2,128,4], index: 2, kind: input, shape index: {}]
  %s3 = inlined_call_operand.vmem [shape: f32[2,128,1], index: 3, kind: input, shape index: {}]
  %s4 = inlined_call_operand.vmem [shape: f32[16,128], index: 4, kind: input, shape index: {}]
  %s5 = inlined_call_operand.vmem [shape: f32[16,32], index: 5, kind: input, shape index: {}]
  %s6 = inlined_call_operand.vmem [shape: f32[1,32], index: 6, kind: input, shape index: {}]
  %s7 = inlined_call_operand.vmem [shape: f32[2,32,64], index: 7, kind: input, shape index: {}]
  %s8 = inlined_call_operand.vmem [shape: f32[2,4,32], index: 8, kind: input, shape index: {}]
  %s9 = inlined_call_operand.vmem [shape: f32[2,1,32], index: 9, kind: input, shape index: {}]
  %s10 = inlined_call_operand.vmem [shape: f32[64,32], index: 10, kind: input, shape index: {}]
  %s11 = inlined_call_operand.vmem [shape: f32[1,32], index: 11, kind: input, shape index: {}]
  %s12 = inlined_call_operand.vmem [shape: f32[32,16], index: 12, kind: input, shape index: {}]
  %s13 = inlined_call_operand.vmem [shape: f32[1,16], index: 13, kind: input, shape index: {}]
  %s14 = inlined_call_operand.vmem [shape: f32[1,16], index: 14, kind: input, shape index: {}]
  %s15 = inlined_call_operand.<no memory space> [shape: f32[1,1], index: 15, kind: input, shape index: {}]
  %s16 = inlined_call_operand.vmem [shape: f32[128,16], index: 16, kind: input, shape index: {}]
  %s17 = inlined_call_operand.vmem [shape: f32[1,16], index: 17, kind: input, shape index: {}]
  %s18 = inlined_call_operand.vmem [shape: f32[16,8], index: 18, kind: input, shape index: {}]
  %s19 = inlined_call_operand.vmem [shape: f32[1,8], index: 19, kind: input, shape index: {}]
  %s20 = inlined_call_operand.vmem [shape: f32[2,16,8], index: 20, kind: output, shape index: {}]
  %s21 = sld [smem:[#allocation0]]
  $region113: #{tpu_custom_call.1} parent=0
    _
  %s23 = ssub.s32 1, %s21
  %s24 = scalar_select 0, %s23, %s21
  %v25 = vstv %s15
  %26 = vst [vmem:[#allocation2] sm:$0x1] %v25
  loop: start=0, step=1, limit=4
  $region2: #{tpu_custom_call.1} parent=0 // loop_pre_header
    _
  $region3: #{tpu_custom_call.1} parent=0 // loop_header
    %s28 = sphi 0, %s32
    %p29 = scmp.ge.s32.totalorder %s28, 4
    %s38 = sphi 0, %s40
    %s41 = sphi 0, %s38
    %s42 = sphi 0, %s41
    %s58 = sphi 0, %s42
    %s64 = sphi 0, %s66
    %s67 = sphi 0, %s64
    %s68 = sphi 0, %s67
    %s84 = sphi 0, %s68
    %s90 = sphi 0, %s92
    %s93 = sphi 0, %s90
    %s94 = sphi 0, %s93
    %s110 = sphi 0, %s94
    %s116 = sphi 0, %s118
    %s119 = sphi 0, %s116
    %s120 = sphi 0, %s119
    %s136 = sphi 0, %s120
    %s140 = sphi 0, %s140
    %s142 = sphi 0, %s140
    %s143 = sphi 0, %s142
    %s157 = sphi 0, %s143
    %s161 = sphi 0, %s161
    %s163 = sphi 0, %s161
    %s164 = sphi 0, %s163
    %s178 = sphi 0, %s164
    %s182 = sphi 0, %s182
    %s184 = sphi 0, %s182
    %s185 = sphi 0, %s184
    %s199 = sphi 0, %s185
    %s203 = sphi 0, %s203
    %s205 = sphi 0, %s203
    %s206 = sphi 0, %s205
    %s220 = sphi 0, %s206
    %s224 = sphi 0, %s224
    %s226 = sphi 0, %s224
    %s227 = sphi 0, %s226
    %s241 = sphi 0, %s227
    %s245 = sphi 0, %s245
    %s247 = sphi 0, %s245
    %s248 = sphi 0, %s247
    %s262 = sphi 0, %s248
    %s266 = sphi 0, %s266
    %s268 = sphi 0, %s266
    %s269 = sphi 0, %s268
    %s283 = sphi 0, %s269
    %s287 = sphi 0, %s287
    %s289 = sphi 0, %s287
    %s290 = sphi 0, %s289
    %s304 = sphi 0, %s290
    %s308 = sphi 0, %s308
    %s310 = sphi 0, %s308
    %s311 = sphi 0, %s310
    %s325 = sphi 0, %s311
    %s329 = sphi 0, %s329
    %s331 = sphi 0, %s329
    %s332 = sphi 0, %s331
    %s346 = sphi 0, %s332
    %s350 = sphi 0, %s350
    %s352 = sphi 0, %s350
    %s353 = sphi 0, %s352
    %s367 = sphi 0, %s353
    %s371 = sphi 0, %s371
    %s373 = sphi 0, %s371
    %s374 = sphi 0, %s373
    %s388 = sphi 0, %s374
    %s392 = sphi 0, %s392
    %s394 = sphi 0, %s392
    %s395 = sphi 0, %s394
    %s409 = sphi 0, %s395
    %s413 = sphi 0, %s413
    %s415 = sphi 0, %s413
    %s416 = sphi 0, %s415
    %s430 = sphi 0, %s416
    %s434 = sphi 0, %s434
    %s436 = sphi 0, %s434
    %s437 = sphi 0, %s436
    %s451 = sphi 0, %s437
    %s455 = sphi 0, %s455
    %s457 = sphi 0, %s455
    %s458 = sphi 0, %s457
    %s472 = sphi 0, %s458
    %s478 = sphi 0, %s480
    %s481 = sphi 0, %s478
    %s482 = sphi 0, %s481
    %s498 = sphi 0, %s482
  $region4: #{tpu_custom_call.1} parent=0 // loop_header_branch
    %31 = sbr.rel (%p29) target = $region8
  $region5: #{tpu_custom_call.1} parent=0 // loop_body
    %s33 = ssub.s32 %s28, 1
    %s34 = ssub.s32 %s28, 2
    %s35 = sadd.s32 %s28, 1
    %s36 = ssub.s32 %s28, %s35
    %p37 = scmp.eq.s32.totalorder %s36, 0
    %s39 = sadd.s32 %s38, 1
    %s40 = scalar_select %p37, %s38, %s39
    %p43 = pneg %p37
    %p44 = scmp.eq.s32.totalorder %s28, 1
    %p45 = por %p43, %p44
    %p46 = scmp.ne.s32.totalorder %s38, %s41
    %p47 = scmp.eq.s32.totalorder %s28, 0
    %p48 = por %p46, %p47
    %p49 = scmp.ne.s32.totalorder %s38, %s41
    %p50 = scmp.eq.s32.totalorder %s33, 1
    %p51 = por %p49, %p50
    %p52 = scmp.ne.s32.totalorder %s41, %s42
    %p53 = scmp.eq.s32.totalorder %s33, 0
    %p54 = por %p52, %p53
    %p55 = scmp.ne.s32.totalorder %s41, %s42
    %p56 = scmp.eq.s32.totalorder %s34, 1
    %p57 = por %p55, %p56
    %p59 = scmp.ne.s32.totalorder %s42, %s58
    %p60 = scmp.eq.s32.totalorder %s34, 0
    %p61 = por %p59, %p60
    %s62 = ssub.s32 %s28, %s35
    %p63 = scmp.eq.s32.totalorder %s62, 0
    %s65 = sadd.s32 %s64, 1
    %s66 = scalar_select %p63, %s64, %s65
    %p69 = pneg %p63
    %p70 = scmp.eq.s32.totalorder %s28, 1
    %p71 = por %p69, %p70
    %p72 = scmp.ne.s32.totalorder %s64, %s67
    %p73 = scmp.eq.s32.totalorder %s28, 0
    %p74 = por %p72, %p73
    %p75 = scmp.ne.s32.totalorder %s64, %s67
    %p76 = scmp.eq.s32.totalorder %s33, 1
    %p77 = por %p75, %p76
    %p78 = scmp.ne.s32.totalorder %s67, %s68
    %p79 = scmp.eq.s32.totalorder %s33, 0
    %p80 = por %p78, %p79
    %p81 = scmp.ne.s32.totalorder %s67, %s68
    %p82 = scmp.eq.s32.totalorder %s34, 1
    %p83 = por %p81, %p82
    %p85 = scmp.ne.s32.totalorder %s68, %s84
    %p86 = scmp.eq.s32.totalorder %s34, 0
    %p87 = por %p85, %p86
    %s88 = ssub.s32 %s28, %s35
    %p89 = scmp.eq.s32.totalorder %s88, 0
    %s91 = sadd.s32 %s90, 1
    %s92 = scalar_select %p89, %s90, %s91
    %p95 = pneg %p89
    %p96 = scmp.eq.s32.totalorder %s28, 1
    %p97 = por %p95, %p96
    %p98 = scmp.ne.s32.totalorder %s90, %s93
    %p99 = scmp.eq.s32.totalorder %s28, 0
    %p100 = por %p98, %p99
    %p101 = scmp.ne.s32.totalorder %s90, %s93
    %p102 = scmp.eq.s32.totalorder %s33, 1
    %p103 = por %p101, %p102
    %p104 = scmp.ne.s32.totalorder %s93, %s94
    %p105 = scmp.eq.s32.totalorder %s33, 0
    %p106 = por %p104, %p105
    %p107 = scmp.ne.s32.totalorder %s93, %s94
    %p108 = scmp.eq.s32.totalorder %s34, 1
    %p109 = por %p107, %p108
    %p111 = scmp.ne.s32.totalorder %s94, %s110
    %p112 = scmp.eq.s32.totalorder %s34, 0
    %p113 = por %p111, %p112
    %s114 = ssub.s32 %s28, %s35
    %p115 = scmp.eq.s32.totalorder %s114, 0
    %s117 = sadd.s32 %s116, 1
    %s118 = scalar_select %p115, %s116, %s117
    %p121 = pneg %p115
    %p122 = scmp.eq.s32.totalorder %s28, 1
    %p123 = por %p121, %p122
    %p124 = scmp.ne.s32.totalorder %s116, %s119
    %p125 = scmp.eq.s32.totalorder %s28, 0
    %p126 = por %p124, %p125
    %p127 = scmp.ne.s32.totalorder %s116, %s119
    %p128 = scmp.eq.s32.totalorder %s33, 1
    %p129 = por %p127, %p128
    %p130 = scmp.ne.s32.totalorder %s119, %s120
    %p131 = scmp.eq.s32.totalorder %s33, 0
    %p132 = por %p130, %p131
    %p133 = scmp.ne.s32.totalorder %s119, %s120
    %p134 = scmp.eq.s32.totalorder %s34, 1
    %p135 = por %p133, %p134
    %p137 = scmp.ne.s32.totalorder %s120, %s136
    %p138 = scmp.eq.s32.totalorder %s34, 0
    %p139 = por %p137, %p138
    %s141 = sadd.s32 %s140, 1
    %p144 = scmp.eq.s32.totalorder %s28, 1
    %p145 = scmp.ne.s32.totalorder %s140, %s142
    %p146 = scmp.eq.s32.totalorder %s28, 0
    %p147 = por %p145, %p146
    %p148 = scmp.ne.s32.totalorder %s140, %s142
    %p149 = scmp.eq.s32.totalorder %s33, 1
    %p150 = por %p148, %p149
    %p151 = scmp.ne.s32.totalorder %s142, %s143
    %p152 = scmp.eq.s32.totalorder %s33, 0
    %p153 = por %p151, %p152
    %p154 = scmp.ne.s32.totalorder %s142, %s143
    %p155 = scmp.eq.s32.totalorder %s34, 1
    %p156 = por %p154, %p155
    %p158 = scmp.ne.s32.totalorder %s143, %s157
    %p159 = scmp.eq.s32.totalorder %s34, 0
    %p160 = por %p158, %p159
    %s162 = sadd.s32 %s161, 1
    %p165 = scmp.eq.s32.totalorder %s28, 1
    %p166 = scmp.ne.s32.totalorder %s161, %s163
    %p167 = scmp.eq.s32.totalorder %s28, 0
    %p168 = por %p166, %p167
    %p169 = scmp.ne.s32.totalorder %s161, %s163
    %p170 = scmp.eq.s32.totalorder %s33, 1
    %p171 = por %p169, %p170
    %p172 = scmp.ne.s32.totalorder %s163, %s164
    %p173 = scmp.eq.s32.totalorder %s33, 0
    %p174 = por %p172, %p173
    %p175 = scmp.ne.s32.totalorder %s163, %s164
    %p176 = scmp.eq.s32.totalorder %s34, 1
    %p177 = por %p175, %p176
    %p179 = scmp.ne.s32.totalorder %s164, %s178
    %p180 = scmp.eq.s32.totalorder %s34, 0
    %p181 = por %p179, %p180
    %s183 = sadd.s32 %s182, 1
    %p186 = scmp.eq.s32.totalorder %s28, 1
    %p187 = scmp.ne.s32.totalorder %s182, %s184
    %p188 = scmp.eq.s32.totalorder %s28, 0
    %p189 = por %p187, %p188
    %p190 = scmp.ne.s32.totalorder %s182, %s184
    %p191 = scmp.eq.s32.totalorder %s33, 1
    %p192 = por %p190, %p191
    %p193 = scmp.ne.s32.totalorder %s184, %s185
    %p194 = scmp.eq.s32.totalorder %s33, 0
    %p195 = por %p193, %p194
    %p196 = scmp.ne.s32.totalorder %s184, %s185
    %p197 = scmp.eq.s32.totalorder %s34, 1
    %p198 = por %p196, %p197
    %p200 = scmp.ne.s32.totalorder %s185, %s199
    %p201 = scmp.eq.s32.totalorder %s34, 0
    %p202 = por %p200, %p201
    %s204 = sadd.s32 %s203, 1
    %p207 = scmp.eq.s32.totalorder %s28, 1
    %p208 = scmp.ne.s32.totalorder %s203, %s205
    %p209 = scmp.eq.s32.totalorder %s28, 0
    %p210 = por %p208, %p209
    %p211 = scmp.ne.s32.totalorder %s203, %s205
    %p212 = scmp.eq.s32.totalorder %s33, 1
    %p213 = por %p211, %p212
    %p214 = scmp.ne.s32.totalorder %s205, %s206
    %p215 = scmp.eq.s32.totalorder %s33, 0
    %p216 = por %p214, %p215
    %p217 = scmp.ne.s32.totalorder %s205, %s206
    %p218 = scmp.eq.s32.totalorder %s34, 1
    %p219 = por %p217, %p218
    %p221 = scmp.ne.s32.totalorder %s206, %s220
    %p222 = scmp.eq.s32.totalorder %s34, 0
    %p223 = por %p221, %p222
    %s225 = sadd.s32 %s224, 1
    %p228 = scmp.eq.s32.totalorder %s28, 1
    %p229 = scmp.ne.s32.totalorder %s224, %s226
    %p230 = scmp.eq.s32.totalorder %s28, 0
    %p231 = por %p229, %p230
    %p232 = scmp.ne.s32.totalorder %s224, %s226
    %p233 = scmp.eq.s32.totalorder %s33, 1
    %p234 = por %p232, %p233
    %p235 = scmp.ne.s32.totalorder %s226, %s227
    %p236 = scmp.eq.s32.totalorder %s33, 0
    %p237 = por %p235, %p236
    %p238 = scmp.ne.s32.totalorder %s226, %s227
    %p239 = scmp.eq.s32.totalorder %s34, 1
    %p240 = por %p238, %p239
    %p242 = scmp.ne.s32.totalorder %s227, %s241
    %p243 = scmp.eq.s32.totalorder %s34, 0
    %p244 = por %p242, %p243
    %s246 = sadd.s32 %s245, 1
    %p249 = scmp.eq.s32.totalorder %s28, 1
    %p250 = scmp.ne.s32.totalorder %s245, %s247
    %p251 = scmp.eq.s32.totalorder %s28, 0
    %p252 = por %p250, %p251
    %p253 = scmp.ne.s32.totalorder %s245, %s247
    %p254 = scmp.eq.s32.totalorder %s33, 1
    %p255 = por %p253, %p254
    %p256 = scmp.ne.s32.totalorder %s247, %s248
    %p257 = scmp.eq.s32.totalorder %s33, 0
    %p258 = por %p256, %p257
    %p259 = scmp.ne.s32.totalorder %s247, %s248
    %p260 = scmp.eq.s32.totalorder %s34, 1
    %p261 = por %p259, %p260
    %p263 = scmp.ne.s32.totalorder %s248, %s262
    %p264 = scmp.eq.s32.totalorder %s34, 0
    %p265 = por %p263, %p264
    %s267 = sadd.s32 %s266, 1
    %p270 = scmp.eq.s32.totalorder %s28, 1
    %p271 = scmp.ne.s32.totalorder %s266, %s268
    %p272 = scmp.eq.s32.totalorder %s28, 0
    %p273 = por %p271, %p272
    %p274 = scmp.ne.s32.totalorder %s266, %s268
    %p275 = scmp.eq.s32.totalorder %s33, 1
    %p276 = por %p274, %p275
    %p277 = scmp.ne.s32.totalorder %s268, %s269
    %p278 = scmp.eq.s32.totalorder %s33, 0
    %p279 = por %p277, %p278
    %p280 = scmp.ne.s32.totalorder %s268, %s269
    %p281 = scmp.eq.s32.totalorder %s34, 1
    %p282 = por %p280, %p281
    %p284 = scmp.ne.s32.totalorder %s269, %s283
    %p285 = scmp.eq.s32.totalorder %s34, 0
    %p286 = por %p284, %p285
    %s288 = sadd.s32 %s287, 1
    %p291 = scmp.eq.s32.totalorder %s28, 1
    %p292 = scmp.ne.s32.totalorder %s287, %s289
    %p293 = scmp.eq.s32.totalorder %s28, 0
    %p294 = por %p292, %p293
    %p295 = scmp.ne.s32.totalorder %s287, %s289
    %p296 = scmp.eq.s32.totalorder %s33, 1
    %p297 = por %p295, %p296
    %p298 = scmp.ne.s32.totalorder %s289, %s290
    %p299 = scmp.eq.s32.totalorder %s33, 0
    %p300 = por %p298, %p299
    %p301 = scmp.ne.s32.totalorder %s289, %s290
    %p302 = scmp.eq.s32.totalorder %s34, 1
    %p303 = por %p301, %p302
    %p305 = scmp.ne.s32.totalorder %s290, %s304
    %p306 = scmp.eq.s32.totalorder %s34, 0
    %p307 = por %p305, %p306
    %s309 = sadd.s32 %s308, 1
    %p312 = scmp.eq.s32.totalorder %s28, 1
    %p313 = scmp.ne.s32.totalorder %s308, %s310
    %p314 = scmp.eq.s32.totalorder %s28, 0
    %p315 = por %p313, %p314
    %p316 = scmp.ne.s32.totalorder %s308, %s310
    %p317 = scmp.eq.s32.totalorder %s33, 1
    %p318 = por %p316, %p317
    %p319 = scmp.ne.s32.totalorder %s310, %s311
    %p320 = scmp.eq.s32.totalorder %s33, 0
    %p321 = por %p319, %p320
    %p322 = scmp.ne.s32.totalorder %s310, %s311
    %p323 = scmp.eq.s32.totalorder %s34, 1
    %p324 = por %p322, %p323
    %p326 = scmp.ne.s32.totalorder %s311, %s325
    %p327 = scmp.eq.s32.totalorder %s34, 0
    %p328 = por %p326, %p327
    %s330 = sadd.s32 %s329, 1
    %p333 = scmp.eq.s32.totalorder %s28, 1
    %p334 = scmp.ne.s32.totalorder %s329, %s331
    %p335 = scmp.eq.s32.totalorder %s28, 0
    %p336 = por %p334, %p335
    %p337 = scmp.ne.s32.totalorder %s329, %s331
    %p338 = scmp.eq.s32.totalorder %s33, 1
    %p339 = por %p337, %p338
    %p340 = scmp.ne.s32.totalorder %s331, %s332
    %p341 = scmp.eq.s32.totalorder %s33, 0
    %p342 = por %p340, %p341
    %p343 = scmp.ne.s32.totalorder %s331, %s332
    %p344 = scmp.eq.s32.totalorder %s34, 1
    %p345 = por %p343, %p344
    %p347 = scmp.ne.s32.totalorder %s332, %s346
    %p348 = scmp.eq.s32.totalorder %s34, 0
    %p349 = por %p347, %p348
    %s351 = sadd.s32 %s350, 1
    %p354 = scmp.eq.s32.totalorder %s28, 1
    %p355 = scmp.ne.s32.totalorder %s350, %s352
    %p356 = scmp.eq.s32.totalorder %s28, 0
    %p357 = por %p355, %p356
    %p358 = scmp.ne.s32.totalorder %s350, %s352
    %p359 = scmp.eq.s32.totalorder %s33, 1
    %p360 = por %p358, %p359
    %p361 = scmp.ne.s32.totalorder %s352, %s353
    %p362 = scmp.eq.s32.totalorder %s33, 0
    %p363 = por %p361, %p362
    %p364 = scmp.ne.s32.totalorder %s352, %s353
    %p365 = scmp.eq.s32.totalorder %s34, 1
    %p366 = por %p364, %p365
    %p368 = scmp.ne.s32.totalorder %s353, %s367
    %p369 = scmp.eq.s32.totalorder %s34, 0
    %p370 = por %p368, %p369
    %s372 = sadd.s32 %s371, 1
    %p375 = scmp.eq.s32.totalorder %s28, 1
    %p376 = scmp.ne.s32.totalorder %s371, %s373
    %p377 = scmp.eq.s32.totalorder %s28, 0
    %p378 = por %p376, %p377
    %p379 = scmp.ne.s32.totalorder %s371, %s373
    %p380 = scmp.eq.s32.totalorder %s33, 1
    %p381 = por %p379, %p380
    %p382 = scmp.ne.s32.totalorder %s373, %s374
    %p383 = scmp.eq.s32.totalorder %s33, 0
    %p384 = por %p382, %p383
    %p385 = scmp.ne.s32.totalorder %s373, %s374
    %p386 = scmp.eq.s32.totalorder %s34, 1
    %p387 = por %p385, %p386
    %p389 = scmp.ne.s32.totalorder %s374, %s388
    %p390 = scmp.eq.s32.totalorder %s34, 0
    %p391 = por %p389, %p390
    %s393 = sadd.s32 %s392, 1
    %p396 = scmp.eq.s32.totalorder %s28, 1
    %p397 = scmp.ne.s32.totalorder %s392, %s394
    %p398 = scmp.eq.s32.totalorder %s28, 0
    %p399 = por %p397, %p398
    %p400 = scmp.ne.s32.totalorder %s392, %s394
    %p401 = scmp.eq.s32.totalorder %s33, 1
    %p402 = por %p400, %p401
    %p403 = scmp.ne.s32.totalorder %s394, %s395
    %p404 = scmp.eq.s32.totalorder %s33, 0
    %p405 = por %p403, %p404
    %p406 = scmp.ne.s32.totalorder %s394, %s395
    %p407 = scmp.eq.s32.totalorder %s34, 1
    %p408 = por %p406, %p407
    %p410 = scmp.ne.s32.totalorder %s395, %s409
    %p411 = scmp.eq.s32.totalorder %s34, 0
    %p412 = por %p410, %p411
    %s414 = sadd.s32 %s413, 1
    %p417 = scmp.eq.s32.totalorder %s28, 1
    %p418 = scmp.ne.s32.totalorder %s413, %s415
    %p419 = scmp.eq.s32.totalorder %s28, 0
    %p420 = por %p418, %p419
    %p421 = scmp.ne.s32.totalorder %s413, %s415
    %p422 = scmp.eq.s32.totalorder %s33, 1
    %p423 = por %p421, %p422
    %p424 = scmp.ne.s32.totalorder %s415, %s416
    %p425 = scmp.eq.s32.totalorder %s33, 0
    %p426 = por %p424, %p425
    %p427 = scmp.ne.s32.totalorder %s415, %s416
    %p428 = scmp.eq.s32.totalorder %s34, 1
    %p429 = por %p427, %p428
    %p431 = scmp.ne.s32.totalorder %s416, %s430
    %p432 = scmp.eq.s32.totalorder %s34, 0
    %p433 = por %p431, %p432
    %s435 = sadd.s32 %s434, 1
    %p438 = scmp.eq.s32.totalorder %s28, 1
    %p439 = scmp.ne.s32.totalorder %s434, %s436
    %p440 = scmp.eq.s32.totalorder %s28, 0
    %p441 = por %p439, %p440
    %p442 = scmp.ne.s32.totalorder %s434, %s436
    %p443 = scmp.eq.s32.totalorder %s33, 1
    %p444 = por %p442, %p443
    %p445 = scmp.ne.s32.totalorder %s436, %s437
    %p446 = scmp.eq.s32.totalorder %s33, 0
    %p447 = por %p445, %p446
    %p448 = scmp.ne.s32.totalorder %s436, %s437
    %p449 = scmp.eq.s32.totalorder %s34, 1
    %p450 = por %p448, %p449
    %p452 = scmp.ne.s32.totalorder %s437, %s451
    %p453 = scmp.eq.s32.totalorder %s34, 0
    %p454 = por %p452, %p453
    %s456 = sadd.s32 %s455, 1
    %p459 = scmp.eq.s32.totalorder %s28, 1
    %p460 = scmp.ne.s32.totalorder %s455, %s457
    %p461 = scmp.eq.s32.totalorder %s28, 0
    %p462 = por %p460, %p461
    %p463 = scmp.ne.s32.totalorder %s455, %s457
    %p464 = scmp.eq.s32.totalorder %s33, 1
    %p465 = por %p463, %p464
    %p466 = scmp.ne.s32.totalorder %s457, %s458
    %p467 = scmp.eq.s32.totalorder %s33, 0
    %p468 = por %p466, %p467
    %p469 = scmp.ne.s32.totalorder %s457, %s458
    %p470 = scmp.eq.s32.totalorder %s34, 1
    %p471 = por %p469, %p470
    %p473 = scmp.ne.s32.totalorder %s458, %s472
    %p474 = scmp.eq.s32.totalorder %s34, 0
    %p475 = por %p473, %p474
    %s476 = ssub.s32 %s28, %s35
    %p477 = scmp.eq.s32.totalorder %s476, 0
    %s479 = sadd.s32 %s478, 1
    %s480 = scalar_select %p477, %s478, %s479
    %p483 = pneg %p477
    %p484 = scmp.eq.s32.totalorder %s28, 1
    %p485 = por %p483, %p484
    %p486 = scmp.ne.s32.totalorder %s478, %s481
    %p487 = scmp.eq.s32.totalorder %s28, 0
    %p488 = por %p486, %p487
    %p489 = scmp.ne.s32.totalorder %s478, %s481
    %p490 = scmp.eq.s32.totalorder %s33, 1
    %p491 = por %p489, %p490
    %p492 = scmp.ne.s32.totalorder %s481, %s482
    %p493 = scmp.eq.s32.totalorder %s33, 0
    %p494 = por %p492, %p493
    %p495 = scmp.ne.s32.totalorder %s481, %s482
    %p496 = scmp.eq.s32.totalorder %s34, 1
    %p497 = por %p495, %p496
    %p499 = scmp.ne.s32.totalorder %s482, %s498
    %p500 = scmp.eq.s32.totalorder %s34, 0
    %p501 = por %p499, %p500
    %p502 = scmp.le.s32.totalorder 1, %s28
    %p503 = scmp.lt.s32.totalorder %s28, 3
    %p504 = pnand %p502, %p503
    %p505 = pneg %p504
    // Predicated region
    $region9: #{tpu_custom_call.1} parent=5 // pred_check
      _
    $region10: #{tpu_custom_call.1} parent=5 // pred_check_branch
      %507 = sbr.rel (%p504) target = $region12
    $region11: #{tpu_custom_call.1} parent=5 // pred_region
      %s508 = ssub.s32 %s28, 1
      // Predicated region
      $region13: #{tpu_custom_call.1} parent=11 // pred_check
        %p509 = pneg %p153
      $region14: #{tpu_custom_call.1} parent=11 // pred_check_branch
        %511 = sbr.rel (%p509) target = $region16
      $region15: #{tpu_custom_call.1} parent=11 // pred_region
        _
      $region16: #{tpu_custom_call.1} parent=11 // pred_fallthru
        _
      // Predicated region
      $region17: #{tpu_custom_call.1} parent=11 // pred_check
        %p512 = pneg %p174
      $region18: #{tpu_custom_call.1} parent=11 // pred_check_branch
        %514 = sbr.rel (%p512) target = $region20
      $region19: #{tpu_custom_call.1} parent=11 // pred_region
        _
      $region20: #{tpu_custom_call.1} parent=11 // pred_fallthru
        _
      // Predicated region
      $region21: #{tpu_custom_call.1} parent=11 // pred_check
        %p515 = pneg %p195
      $region22: #{tpu_custom_call.1} parent=11 // pred_check_branch
        %517 = sbr.rel (%p515) target = $region24
      $region23: #{tpu_custom_call.1} parent=11 // pred_region
        _
      $region24: #{tpu_custom_call.1} parent=11 // pred_fallthru
        _
      // Predicated region
      $region25: #{tpu_custom_call.1} parent=11 // pred_check
        %p518 = pneg %p216
      $region26: #{tpu_custom_call.1} parent=11 // pred_check_branch
        %520 = sbr.rel (%p518) target = $region28
      $region27: #{tpu_custom_call.1} parent=11 // pred_region
        _
      $region28: #{tpu_custom_call.1} parent=11 // pred_fallthru
        _
      // Predicated region
      $region29: #{tpu_custom_call.1} parent=11 // pred_check
        %p521 = pneg %p237
      $region30: #{tpu_custom_call.1} parent=11 // pred_check_branch
        %523 = sbr.rel (%p521) target = $region32
      $region31: #{tpu_custom_call.1} parent=11 // pred_region
        _
      $region32: #{tpu_custom_call.1} parent=11 // pred_fallthru
        _
      // Predicated region
      $region33: #{tpu_custom_call.1} parent=11 // pred_check
        %p524 = pneg %p258
      $region34: #{tpu_custom_call.1} parent=11 // pred_check_branch
        %526 = sbr.rel (%p524) target = $region36
      $region35: #{tpu_custom_call.1} parent=11 // pred_region
        _
      $region36: #{tpu_custom_call.1} parent=11 // pred_fallthru
        _
      // Predicated region
      $region37: #{tpu_custom_call.1} parent=11 // pred_check
        %p527 = pneg %p279
      $region38: #{tpu_custom_call.1} parent=11 // pred_check_branch
        %529 = sbr.rel (%p527) target = $region40
      $region39: #{tpu_custom_call.1} parent=11 // pred_region
        _
      $region40: #{tpu_custom_call.1} parent=11 // pred_fallthru
        _
      // Predicated region
      $region41: #{tpu_custom_call.1} parent=11 // pred_check
        %p530 = pneg %p300
      $region42: #{tpu_custom_call.1} parent=11 // pred_check_branch
        %532 = sbr.rel (%p530) target = $region44
      $region43: #{tpu_custom_call.1} parent=11 // pred_region
        _
      $region44: #{tpu_custom_call.1} parent=11 // pred_fallthru
        _
      // Predicated region
      $region45: #{tpu_custom_call.1} parent=11 // pred_check
        %p533 = pneg %p321
      $region46: #{tpu_custom_call.1} parent=11 // pred_check_branch
        %535 = sbr.rel (%p533) target = $region48
      $region47: #{tpu_custom_call.1} parent=11 // pred_region
        _
      $region48: #{tpu_custom_call.1} parent=11 // pred_fallthru
        _
      // Predicated region
      $region49: #{tpu_custom_call.1} parent=11 // pred_check
        %p536 = pneg %p342
      $region50: #{tpu_custom_call.1} parent=11 // pred_check_branch
        %538 = sbr.rel (%p536) target = $region52
      $region51: #{tpu_custom_call.1} parent=11 // pred_region
        _
      $region52: #{tpu_custom_call.1} parent=11 // pred_fallthru
        _
      // Predicated region
      $region53: #{tpu_custom_call.1} parent=11 // pred_check
        %p539 = pneg %p363
      $region54: #{tpu_custom_call.1} parent=11 // pred_check_branch
        %541 = sbr.rel (%p539) target = $region56
      $region55: #{tpu_custom_call.1} parent=11 // pred_region
        _
      $region56: #{tpu_custom_call.1} parent=11 // pred_fallthru
        _
      // Predicated region
      $region57: #{tpu_custom_call.1} parent=11 // pred_check
        %p542 = pneg %p384
      $region58: #{tpu_custom_call.1} parent=11 // pred_check_branch
        %544 = sbr.rel (%p542) target = $region60
      $region59: #{tpu_custom_call.1} parent=11 // pred_region
        _
      $region60: #{tpu_custom_call.1} parent=11 // pred_fallthru
        _
      // Predicated region
      $region61: #{tpu_custom_call.1} parent=11 // pred_check
        %p545 = pneg %p405
      $region62: #{tpu_custom_call.1} parent=11 // pred_check_branch
        %547 = sbr.rel (%p545) target = $region64
      $region63: #{tpu_custom_call.1} parent=11 // pred_region
        _
      $region64: #{tpu_custom_call.1} parent=11 // pred_fallthru
        _
      // Predicated region
      $region65: #{tpu_custom_call.1} parent=11 // pred_check
        %p548 = pneg %p426
      $region66: #{tpu_custom_call.1} parent=11 // pred_check_branch
        %550 = sbr.rel (%p548) target = $region68
      $region67: #{tpu_custom_call.1} parent=11 // pred_region
        _
      $region68: #{tpu_custom_call.1} parent=11 // pred_fallthru
        _
      // Predicated region
      $region69: #{tpu_custom_call.1} parent=11 // pred_check
        %p551 = pneg %p447
      $region70: #{tpu_custom_call.1} parent=11 // pred_check_branch
        %553 = sbr.rel (%p551) target = $region72
      $region71: #{tpu_custom_call.1} parent=11 // pred_region
        _
      $region72: #{tpu_custom_call.1} parent=11 // pred_fallthru
        _
      // Predicated region
      $region73: #{tpu_custom_call.1} parent=11 // pred_check
        %p554 = pneg %p468
      $region74: #{tpu_custom_call.1} parent=11 // pred_check_branch
        %556 = sbr.rel (%p554) target = $region76
      $region75: #{tpu_custom_call.1} parent=11 // pred_region
        _
      $region76: #{tpu_custom_call.1} parent=11 // pred_fallthru
        _
    $region12: #{tpu_custom_call.1} parent=5 // pred_fallthru
      _
    %p557 = scmp.lt.s32.totalorder %s28, 2
    // Predicated region
    $region77: #{tpu_custom_call.1} parent=5 // pred_check
      %p558 = pneg %p557
    $region78: #{tpu_custom_call.1} parent=5 // pred_check_branch
      %560 = sbr.rel (%p558) target = $region80
    $region79: #{tpu_custom_call.1} parent=5 // pred_region
      // Predicated region
      $region81: #{tpu_custom_call.1} parent=79 // pred_check
        %p561 = pneg %p48
      $region82: #{tpu_custom_call.1} parent=79 // pred_check_branch
        %563 = sbr.rel (%p561) target = $region84
      $region83: #{tpu_custom_call.1} parent=79 // pred_region
        %p564 = scmp.lt.s32.totalorder %s28, 1
        %s565 = scalar_select %p564, %s28, 1
        %s566 = smul.addr %s565, 16
        %s567 = smul.addr %s566, 8
        %s568 = scalar_lea.vmem %s0, %s567
      $region84: #{tpu_custom_call.1} parent=79 // pred_fallthru
        _
      // Predicated region
      $region85: #{tpu_custom_call.1} parent=79 // pred_check
        %p569 = pneg %p74
      $region86: #{tpu_custom_call.1} parent=79 // pred_check_branch
        %571 = sbr.rel (%p569) target = $region88
      $region87: #{tpu_custom_call.1} parent=79 // pred_region
        %p572 = scmp.lt.s32.totalorder %s28, 1
        %s573 = scalar_select %p572, %s28, 1
        %s574 = smul.addr %s573, 16
        %s575 = smul.addr %s574, 8
        %s576 = scalar_lea.vmem %s1, %s575
      $region88: #{tpu_custom_call.1} parent=79 // pred_fallthru
        _
      // Predicated region
      $region89: #{tpu_custom_call.1} parent=79 // pred_check
        %p577 = pneg %p100
      $region90: #{tpu_custom_call.1} parent=79 // pred_check_branch
        %579 = sbr.rel (%p577) target = $region92
      $region91: #{tpu_custom_call.1} parent=79 // pred_region
        %p580 = scmp.lt.s32.totalorder %s28, 1
        %s581 = scalar_select %p580, %s28, 1
        %s582 = smul.addr %s581, 16
        %s583 = smul.addr %s582, 8
        %s584 = scalar_lea.vmem %s2, %s583
      $region92: #{tpu_custom_call.1} parent=79 // pred_fallthru
        _
      // Predicated region
      $region93: #{tpu_custom_call.1} parent=79 // pred_check
        %p585 = pneg %p126
      $region94: #{tpu_custom_call.1} parent=79 // pred_check_branch
        %587 = sbr.rel (%p585) target = $region96
      $region95: #{tpu_custom_call.1} parent=79 // pred_region
        %p588 = scmp.lt.s32.totalorder %s28, 1
        %s589 = scalar_select %p588, %s28, 1
        %s590 = smul.addr %s589, 16
        %s591 = smul.addr %s590, 8
        %s592 = scalar_lea.vmem %s3, %s591
      $region96: #{tpu_custom_call.1} parent=79 // pred_fallthru
        _
    $region80: #{tpu_custom_call.1} parent=5 // pred_fallthru
      _
    %p593 = scmp.le.s32.totalorder 1, %s28
    %p594 = scmp.lt.s32.totalorder %s28, 3
    %p595 = pnand %p593, %p594
    %p596 = pneg %p595
    // Predicated region
    $region97: #{tpu_custom_call.1} parent=5 // pred_check
      _
    $region98: #{tpu_custom_call.1} parent=5 // pred_check_branch
      %598 = sbr.rel (%p595) target = $region100
    $region99: #{tpu_custom_call.1} parent=5 // pred_region
      %s599 = ssub.s32 %s28, 1
      %p600 = scmp.lt.s32.totalorder %s33, 1
      %s601 = scalar_select %p600, %s33, 1
      %s602 = smul.addr %s601, 16
      %s603 = smul.addr %s602, 8
      %s604 = scalar_lea.vmem %s0, %s603
      %p605 = pneg %p54
      %p606 = pneg %p51
      %p607 = scmp.lt.s32.totalorder %s33, 1
      %s608 = scalar_select %p607, %s33, 1
      %s609 = smul.addr %s608, 16
      %s610 = smul.addr %s609, 8
      %s611 = scalar_lea.vmem %s1, %s610
      %p612 = pneg %p80
      %p613 = pneg %p77
      %p614 = scmp.lt.s32.totalorder %s33, 1
      %s615 = scalar_select %p614, %s33, 1
      %s616 = smul.addr %s615, 16
      %s617 = smul.addr %s616, 8
      %s618 = scalar_lea.vmem %s2, %s617
      %p619 = pneg %p106
      %p620 = pneg %p103
      %p621 = scmp.lt.s32.totalorder %s33, 1
      %s622 = scalar_select %p621, %s33, 1
      %s623 = smul.addr %s622, 16
      %s624 = smul.addr %s623, 8
      %s625 = scalar_lea.vmem %s3, %s624
      %p626 = pneg %p132
      %p627 = pneg %p129
      %p628 = pneg %p153
      %p629 = pneg %p150
      %p630 = pneg %p174
      %p631 = pneg %p171
      %p632 = pneg %p195
      %p633 = pneg %p192
      %p634 = pneg %p216
      %p635 = pneg %p213
      %p636 = pneg %p237
      %p637 = pneg %p234
      %p638 = pneg %p258
      %p639 = pneg %p255
      %p640 = pneg %p279
      %p641 = pneg %p276
      %p642 = pneg %p300
      %p643 = pneg %p297
      %p644 = pneg %p321
      %p645 = pneg %p318
      %p646 = pneg %p342
      %p647 = pneg %p339
      %p648 = pneg %p363
      %p649 = pneg %p360
      %p650 = pneg %p384
      %p651 = pneg %p381
      %p652 = pneg %p405
      %p653 = pneg %p402
      %p654 = pneg %p426
      %p655 = pneg %p423
      %p656 = pneg %p447
      %p657 = pneg %p444
      %p658 = pneg %p468
      %p659 = pneg %p465
      %p660 = pneg %p494
      %p661 = pneg %p491
      %p662 = scmp.lt.s32.totalorder %s33, 1
      %s663 = scalar_select %p662, %s33, 1
      %s664 = smul.addr %s663, 2
      %s665 = smul.addr %s664, 8
      %s666 = scalar_lea.vmem %s20, %s665
      %p667 = scmp.lt.s32.totalorder %s33, 1
      %s668 = scalar_select %p667, %s33, 1
      %s669 = smul.addr %s668, 16
      %s670 = smul.addr %s669, 8
      %s671 = scalar_lea.vmem %s0, %s670
      %p672 = scmp.lt.s32.totalorder %s33, 1
      %s673 = scalar_select %p672, %s33, 1
      %s674 = smul.addr %s673, 16
      %s675 = smul.addr %s674, 8
      %s676 = scalar_lea.vmem %s1, %s675
      %p677 = scmp.lt.s32.totalorder %s33, 1
      %s678 = scalar_select %p677, %s33, 1
      %s679 = smul.addr %s678, 16
      %s680 = smul.addr %s679, 8
      %s681 = scalar_lea.vmem %s2, %s680
      %p682 = scmp.lt.s32.totalorder %s33, 1
      %s683 = scalar_select %p682, %s33, 1
      %s684 = smul.addr %s683, 16
      %s685 = smul.addr %s684, 8
      %s686 = scalar_lea.vmem %s3, %s685
      %p687 = scmp.lt.s32.totalorder %s33, 1
      %s688 = scalar_select %p687, %s33, 1
      %s689 = smul.addr %s688, 2
      %s690 = smul.addr %s689, 8
      %s691 = scalar_lea.vmem %s20, %s690
      %v692 = vld [vmem:[%s671] sm:$0xff]
      %v693 = vld [vmem:[%s671 + $0x8] sm:$0xff]
      %v694 = vld [vmem:[%s671 + $0x10] sm:$0xff]
      %v695 = vld [vmem:[%s671 + $0x18] sm:$0xff]
      %v696 = vld [vmem:[%s671 + $0x20] sm:$0xff]
      %v697 = vld [vmem:[%s671 + $0x28] sm:$0xff]
      %v698 = vld [vmem:[%s671 + $0x30] sm:$0xff]
      %v699 = vld [vmem:[%s671 + $0x38] sm:$0xff]
      %v700 = vld [vmem:[%s671 + $0x40] sm:$0xff]
      %v701 = vld [vmem:[%s671 + $0x48] sm:$0xff]
      %v702 = vld [vmem:[%s671 + $0x50] sm:$0xff]
      %v703 = vld [vmem:[%s671 + $0x58] sm:$0xff]
      %v704 = vld [vmem:[%s671 + $0x60] sm:$0xff]
      %v705 = vld [vmem:[%s671 + $0x68] sm:$0xff]
      %v706 = vld [vmem:[%s671 + $0x70] sm:$0xff]
      %v707 = vld [vmem:[%s671 + $0x78] sm:$0xff]
      %v708 = vld [vmem:[%s676] sm:$0xff]
      %v709 = vld [vmem:[%s676 + $0x8] sm:$0xff]
      %v710 = vld [vmem:[%s676 + $0x10] sm:$0xff]
      %v711 = vld [vmem:[%s676 + $0x18] sm:$0xff]
      %v712 = vld [vmem:[%s676 + $0x20] sm:$0xff]
      %v713 = vld [vmem:[%s676 + $0x28] sm:$0xff]
      %v714 = vld [vmem:[%s676 + $0x30] sm:$0xff]
      %v715 = vld [vmem:[%s676 + $0x38] sm:$0xff]
      %v716 = vld [vmem:[%s676 + $0x40] sm:$0xff]
      %v717 = vld [vmem:[%s676 + $0x48] sm:$0xff]
      %v718 = vld [vmem:[%s676 + $0x50] sm:$0xff]
      %v719 = vld [vmem:[%s676 + $0x58] sm:$0xff]
      %v720 = vld [vmem:[%s676 + $0x60] sm:$0xff]
      %v721 = vld [vmem:[%s676 + $0x68] sm:$0xff]
      %v722 = vld [vmem:[%s676 + $0x70] sm:$0xff]
      %v723 = vld [vmem:[%s676 + $0x78] sm:$0xff]
      %v724 = vld [vmem:[%s681] sm:$0xff]
      %v725 = vld [vmem:[%s681 + $0x8] sm:$0xff]
      %v726 = vld [vmem:[%s681 + $0x10] sm:$0xff]
      %v727 = vld [vmem:[%s681 + $0x18] sm:$0xff]
      %v728 = vld [vmem:[%s681 + $0x20] sm:$0xff]
      %v729 = vld [vmem:[%s681 + $0x28] sm:$0xff]
      %v730 = vld [vmem:[%s681 + $0x30] sm:$0xff]
      %v731 = vld [vmem:[%s681 + $0x38] sm:$0xff]
      %v732 = vld [vmem:[%s681 + $0x40] sm:$0xff]
      %v733 = vld [vmem:[%s681 + $0x48] sm:$0xff]
      %v734 = vld [vmem:[%s681 + $0x50] sm:$0xff]
      %v735 = vld [vmem:[%s681 + $0x58] sm:$0xff]
      %v736 = vld [vmem:[%s681 + $0x60] sm:$0xff]
      %v737 = vld [vmem:[%s681 + $0x68] sm:$0xff]
      %v738 = vld [vmem:[%s681 + $0x70] sm:$0xff]
      %v739 = vld [vmem:[%s681 + $0x78] sm:$0xff]
      %v740 = vld [vmem:[%s5] sm:$0xff]
      %v741 = vld [vmem:[%s5 + $0x8] sm:$0xff]
      %v742 = vld [vmem:[%s6] sm:$0x1]
      %v744 = vperm.slane %v742, 0
      %vm746 = vcmask 130048
      %v748 = vsel %vm746, %v692, 0
      %v751 = vsel %vm746, %v693, 0
      %v754 = vsel %vm746, %v694, 0
      %v757 = vsel %vm746, %v695, 0
      %v760 = vsel %vm746, %v696, 0
      %v763 = vsel %vm746, %v697, 0
      %v766 = vsel %vm746, %v698, 0
      %v769 = vsel %vm746, %v699, 0
      %v772 = vsel %vm746, %v700, 0
      %v775 = vsel %vm746, %v701, 0
      %v778 = vsel %vm746, %v702, 0
      %v781 = vsel %vm746, %v703, 0
      %v784 = vsel %vm746, %v704, 0
      %v787 = vsel %vm746, %v705, 0
      %v790 = vsel %vm746, %v706, 0
      %v793 = vsel %vm746, %v707, 0
      %795 = vmatpush.msra.mxu0 0.0
      %796 = vmatpush.msra.mxu0 0.0
      %797 = vmatpush.msra.mxu0 0.0
      %798 = vmatpush.msra.mxu0 0.0
      %799 = vmatpush.msra.mxu0 0.0
      %800 = vmatpush.msra.mxu0 0.0
      %801 = vmatpush.msra.mxu0 0.0
      %802 = vmatpush.msra.mxu0 0.0
      %803 = vmatpush.msra.mxu0 0.0
      %804 = vmatpush.msra.mxu0 0.0
      %805 = vmatpush.msra.mxu0 0.0
      %806 = vmatpush.msra.mxu0 0.0
      %807 = vmatpush.msra.mxu0 0.0
      %808 = vmatpush.msra.mxu0 0.0
      %809 = vmatpush.msra.mxu0 %v741
      %810 = vmatpush.msra.mxu0 %v740
      %811 = vmatmul.f32.gmra.mxu0 %v748
      %v812 = vpop.f32.mrf.mxu0
      %v813 = vadd.f32 %v744, %v812
      %814 = vmatmul.f32.gmra.mxu0 %v751
      %v815 = vpop.f32.mrf.mxu0
      %v816 = vadd.f32 %v744, %v815
      %817 = vmatmul.f32.gmra.mxu0 %v754
      %v818 = vpop.f32.mrf.mxu0
      %v819 = vadd.f32 %v744, %v818
      %820 = vmatmul.f32.gmra.mxu0 %v757
      %v821 = vpop.f32.mrf.mxu0
      %v822 = vadd.f32 %v744, %v821
      %823 = vmatmul.f32.gmra.mxu0 %v760
      %v824 = vpop.f32.mrf.mxu0
      %v825 = vadd.f32 %v744, %v824
      %826 = vmatmul.f32.gmra.mxu0 %v763
      %v827 = vpop.f32.mrf.mxu0
      %v828 = vadd.f32 %v744, %v827
      %829 = vmatmul.f32.gmra.mxu0 %v766
      %v830 = vpop.f32.mrf.mxu0
      %v831 = vadd.f32 %v744, %v830
      %832 = vmatmul.f32.gmra.mxu0 %v769
      %v833 = vpop.f32.mrf.mxu0
      %v834 = vadd.f32 %v744, %v833
      %835 = vmatmul.f32.gmra.mxu0 %v772
      %v836 = vpop.f32.mrf.mxu0
      %v837 = vadd.f32 %v744, %v836
      %838 = vmatmul.f32.gmra.mxu0 %v775
      %v839 = vpop.f32.mrf.mxu0
      %v840 = vadd.f32 %v744, %v839
      %841 = vmatmul.f32.gmra.mxu0 %v778
      %v842 = vpop.f32.mrf.mxu0
      %v843 = vadd.f32 %v744, %v842
      %844 = vmatmul.f32.gmra.mxu0 %v781
      %v845 = vpop.f32.mrf.mxu0
      %v846 = vadd.f32 %v744, %v845
      %847 = vmatmul.f32.gmra.mxu0 %v784
      %v848 = vpop.f32.mrf.mxu0
      %v849 = vadd.f32 %v744, %v848
      %850 = vmatmul.f32.gmra.mxu0 %v787
      %v851 = vpop.f32.mrf.mxu0
      %v852 = vadd.f32 %v744, %v851
      %853 = vmatmul.f32.gmra.mxu0 %v790
      %v854 = vpop.f32.mrf.mxu0
      %v855 = vadd.f32 %v744, %v854
      %856 = vmatmul.f32.gmra.mxu0 %v793
      %v857 = vpop.f32.mrf.mxu0
      %v858 = vadd.f32 %v744, %v857
      %859 = vdwg.mxu0
      %v860 = vld [vmem:[%s7] sm:$0xff]
      %v861 = vld [vmem:[%s7 + $0x8] sm:$0xff]
      %v862 = vld [vmem:[%s7 + $0x10] sm:$0xff]
      %v863 = vld [vmem:[%s7 + $0x18] sm:$0xff]
      %vm864 = vcmask 261120
      %v866 = vsel %vm864, %v813, 0
      %v869 = vsel %vm864, %v816, 0
      %v872 = vsel %vm864, %v819, 0
      %v875 = vsel %vm864, %v822, 0
      %v878 = vsel %vm864, %v825, 0
      %v881 = vsel %vm864, %v828, 0
      %v884 = vsel %vm864, %v831, 0
      %v887 = vsel %vm864, %v834, 0
      %v890 = vsel %vm864, %v837, 0
      %v893 = vsel %vm864, %v840, 0
      %v896 = vsel %vm864, %v843, 0
      %v899 = vsel %vm864, %v846, 0
      %v902 = vsel %vm864, %v849, 0
      %v905 = vsel %vm864, %v852, 0
      %v908 = vsel %vm864, %v855, 0
      %v911 = vsel %vm864, %v858, 0
      %913 = vmatpush.msra.mxu0 0.0
      %914 = vmatpush.msra.mxu0 0.0
      %915 = vmatpush.msra.mxu0 0.0
      %916 = vmatpush.msra.mxu0 0.0
      %917 = vmatpush.msra.mxu0 0.0
      %918 = vmatpush.msra.mxu0 0.0
      %919 = vmatpush.msra.mxu0 0.0
      %920 = vmatpush.msra.mxu0 0.0
      %921 = vmatpush.msra.mxu0 0.0
      %922 = vmatpush.msra.mxu0 0.0
      %923 = vmatpush.msra.mxu0 0.0
      %924 = vmatpush.msra.mxu0 0.0
      %925 = vmatpush.msra.mxu0 %v863
      %926 = vmatpush.msra.mxu0 %v862
      %927 = vmatpush.msra.mxu0 %v861
      %928 = vmatpush.msra.mxu0 %v860
      %929 = vmatmul.f32.gmra.mxu0 %v866
      %v930 = vpop.f32.mrf.mxu0
      %v931 = vadd.f32 0.0, %v930
      %932 = vmatmul.f32.gmra.mxu0 %v869
      %v933 = vpop.f32.mrf.mxu0
      %v934 = vadd.f32 0.0, %v933
      %935 = vmatmul.f32.gmra.mxu0 %v872
      %v936 = vpop.f32.mrf.mxu0
      %v937 = vadd.f32 0.0, %v936
      %938 = vmatmul.f32.gmra.mxu0 %v875
      %v939 = vpop.f32.mrf.mxu0
      %v940 = vadd.f32 0.0, %v939
      %941 = vmatmul.f32.gmra.mxu0 %v878
      %v942 = vpop.f32.mrf.mxu0
      %v943 = vadd.f32 0.0, %v942
      %944 = vmatmul.f32.gmra.mxu0 %v881
      %v945 = vpop.f32.mrf.mxu0
      %v946 = vadd.f32 0.0, %v945
      %947 = vmatmul.f32.gmra.mxu0 %v884
      %v948 = vpop.f32.mrf.mxu0
      %v949 = vadd.f32 0.0, %v948
      %950 = vmatmul.f32.gmra.mxu0 %v887
      %v951 = vpop.f32.mrf.mxu0
      %v952 = vadd.f32 0.0, %v951
      %953 = vmatmul.f32.gmra.mxu0 %v890
      %v954 = vpop.f32.mrf.mxu0
      %v955 = vadd.f32 0.0, %v954
      %956 = vmatmul.f32.gmra.mxu0 %v893
      %v957 = vpop.f32.mrf.mxu0
      %v958 = vadd.f32 0.0, %v957
      %959 = vmatmul.f32.gmra.mxu0 %v896
      %v960 = vpop.f32.mrf.mxu0
      %v961 = vadd.f32 0.0, %v960
      %962 = vmatmul.f32.gmra.mxu0 %v899
      %v963 = vpop.f32.mrf.mxu0
      %v964 = vadd.f32 0.0, %v963
      %965 = vmatmul.f32.gmra.mxu0 %v902
      %v966 = vpop.f32.mrf.mxu0
      %v967 = vadd.f32 0.0, %v966
      %968 = vmatmul.f32.gmra.mxu0 %v905
      %v969 = vpop.f32.mrf.mxu0
      %v970 = vadd.f32 0.0, %v969
      %971 = vmatmul.f32.gmra.mxu0 %v908
      %v972 = vpop.f32.mrf.mxu0
      %v973 = vadd.f32 0.0, %v972
      %974 = vmatmul.f32.gmra.mxu0 %v911
      %v975 = vpop.f32.mrf.mxu0
      %v976 = vadd.f32 0.0, %v975
      %977 = vdwg.mxu0
      %v978 = vld [vmem:[%s8] sm:$0xf]
      %vm979 = vcmask 31744
      %v981 = vsel %vm979, %v724, 0
      %v984 = vsel %vm979, %v725, 0
      %v987 = vsel %vm979, %v726, 0
      %v990 = vsel %vm979, %v727, 0
      %v993 = vsel %vm979, %v728, 0
      %v996 = vsel %vm979, %v729, 0
      %v999 = vsel %vm979, %v730, 0
      %v1002 = vsel %vm979, %v731, 0
      %v1005 = vsel %vm979, %v732, 0
      %v1008 = vsel %vm979, %v733, 0
      %v1011 = vsel %vm979, %v734, 0
      %v1014 = vsel %vm979, %v735, 0
      %v1017 = vsel %vm979, %v736, 0
      %v1020 = vsel %vm979, %v737, 0
      %v1023 = vsel %vm979, %v738, 0
      %v1026 = vsel %vm979, %v739, 0
      %vm1028 = vcmask 1043456
      %v1030 = vsel %vm1028, %v978, 0
      %1032 = vmatpush.msra.mxu0 0.0
      %1033 = vmatpush.msra.mxu0 0.0
      %1034 = vmatpush.msra.mxu0 0.0
      %1035 = vmatpush.msra.mxu0 0.0
      %1036 = vmatpush.msra.mxu0 0.0
      %1037 = vmatpush.msra.mxu0 0.0
      %1038 = vmatpush.msra.mxu0 0.0
      %1039 = vmatpush.msra.mxu0 0.0
      %1040 = vmatpush.msra.mxu0 0.0
      %1041 = vmatpush.msra.mxu0 0.0
      %1042 = vmatpush.msra.mxu0 0.0
      %1043 = vmatpush.msra.mxu0 0.0
      %1044 = vmatpush.msra.mxu0 0.0
      %1045 = vmatpush.msra.mxu0 0.0
      %1046 = vmatpush.msra.mxu0 0.0
      %1047 = vmatpush.msra.mxu0 %v1030
      %1048 = vmatmul.f32.gmra.mxu0 %v981
      %v1049 = vpop.f32.mrf.mxu0
      %v1050 = vadd.f32 0.0, %v1049
      %1051 = vmatmul.f32.gmra.mxu0 %v984
      %v1052 = vpop.f32.mrf.mxu0
      %v1053 = vadd.f32 0.0, %v1052
      %1054 = vmatmul.f32.gmra.mxu0 %v987
      %v1055 = vpop.f32.mrf.mxu0
      %v1056 = vadd.f32 0.0, %v1055
      %1057 = vmatmul.f32.gmra.mxu0 %v990
      %v1058 = vpop.f32.mrf.mxu0
      %v1059 = vadd.f32 0.0, %v1058
      %1060 = vmatmul.f32.gmra.mxu0 %v993
      %v1061 = vpop.f32.mrf.mxu0
      %v1062 = vadd.f32 0.0, %v1061
      %1063 = vmatmul.f32.gmra.mxu0 %v996
      %v1064 = vpop.f32.mrf.mxu0
      %v1065 = vadd.f32 0.0, %v1064
      %1066 = vmatmul.f32.gmra.mxu0 %v999
      %v1067 = vpop.f32.mrf.mxu0
      %v1068 = vadd.f32 0.0, %v1067
      %1069 = vmatmul.f32.gmra.mxu0 %v1002
      %v1070 = vpop.f32.mrf.mxu0
      %v1071 = vadd.f32 0.0, %v1070
      %1072 = vmatmul.f32.gmra.mxu0 %v1005
      %v1073 = vpop.f32.mrf.mxu0
      %v1074 = vadd.f32 0.0, %v1073
      %1075 = vmatmul.f32.gmra.mxu0 %v1008
      %v1076 = vpop.f32.mrf.mxu0
      %v1077 = vadd.f32 0.0, %v1076
      %1078 = vmatmul.f32.gmra.mxu0 %v1011
      %v1079 = vpop.f32.mrf.mxu0
      %v1080 = vadd.f32 0.0, %v1079
      %1081 = vmatmul.f32.gmra.mxu0 %v1014
      %v1082 = vpop.f32.mrf.mxu0
      %v1083 = vadd.f32 0.0, %v1082
      %1084 = vmatmul.f32.gmra.mxu0 %v1017
      %v1085 = vpop.f32.mrf.mxu0
      %v1086 = vadd.f32 0.0, %v1085
      %1087 = vmatmul.f32.gmra.mxu0 %v1020
      %v1088 = vpop.f32.mrf.mxu0
      %v1089 = vadd.f32 0.0, %v1088
      %1090 = vmatmul.f32.gmra.mxu0 %v1023
      %v1091 = vpop.f32.mrf.mxu0
      %v1092 = vadd.f32 0.0, %v1091
      %1093 = vmatmul.f32.gmra.mxu0 %v1026
      %v1094 = vpop.f32.mrf.mxu0
      %v1095 = vadd.f32 0.0, %v1094
      %1096 = vdwg.mxu0
      %1097 = vmatpush.msra.mxu0 %v976
      %1098 = vmatpush.msra.mxu0 %v973
      %1099 = vmatpush.msra.mxu0 %v970
      %1100 = vmatpush.msra.mxu0 %v967
      %1101 = vmatpush.msra.mxu0 %v964
      %1102 = vmatpush.msra.mxu0 %v961
      %1103 = vmatpush.msra.mxu0 %v958
      %1104 = vmatpush.msra.mxu0 %v955
      %1105 = vmatpush.msra.mxu0 %v952
      %1106 = vmatpush.msra.mxu0 %v949
      %1107 = vmatpush.msra.mxu0 %v946
      %1108 = vmatpush.msra.mxu0 %v943
      %1109 = vmatpush.msra.mxu0 %v940
      %1110 = vmatpush.msra.mxu0 %v937
      %1111 = vmatpush.msra.mxu0 %v934
      %1112 = vmatpush.msra.mxu0 %v931
      %1113 = vmatmul.f32.gmra.mxu0 %v708
      %v1114 = vpop.f32.mrf.mxu0
      %v1115 = vadd.f32 %v1050, %v1114
      %1116 = vmatmul.f32.gmra.mxu0 %v709
      %v1117 = vpop.f32.mrf.mxu0
      %v1118 = vadd.f32 %v1053, %v1117
      %1119 = vmatmul.f32.gmra.mxu0 %v710
      %v1120 = vpop.f32.mrf.mxu0
      %v1121 = vadd.f32 %v1056, %v1120
      %1122 = vmatmul.f32.gmra.mxu0 %v711
      %v1123 = vpop.f32.mrf.mxu0
      %v1124 = vadd.f32 %v1059, %v1123
      %1125 = vmatmul.f32.gmra.mxu0 %v712
      %v1126 = vpop.f32.mrf.mxu0
      %v1127 = vadd.f32 %v1062, %v1126
      %1128 = vmatmul.f32.gmra.mxu0 %v713
      %v1129 = vpop.f32.mrf.mxu0
      %v1130 = vadd.f32 %v1065, %v1129
      %1131 = vmatmul.f32.gmra.mxu0 %v714
      %v1132 = vpop.f32.mrf.mxu0
      %v1133 = vadd.f32 %v1068, %v1132
      %1134 = vmatmul.f32.gmra.mxu0 %v715
      %v1135 = vpop.f32.mrf.mxu0
      %v1136 = vadd.f32 %v1071, %v1135
      %1137 = vmatmul.f32.gmra.mxu0 %v716
      %v1138 = vpop.f32.mrf.mxu0
      %v1139 = vadd.f32 %v1074, %v1138
      %1140 = vmatmul.f32.gmra.mxu0 %v717
      %v1141 = vpop.f32.mrf.mxu0
      %v1142 = vadd.f32 %v1077, %v1141
      %1143 = vmatmul.f32.gmra.mxu0 %v718
      %v1144 = vpop.f32.mrf.mxu0
      %v1145 = vadd.f32 %v1080, %v1144
      %1146 = vmatmul.f32.gmra.mxu0 %v719
      %v1147 = vpop.f32.mrf.mxu0
      %v1148 = vadd.f32 %v1083, %v1147
      %1149 = vmatmul.f32.gmra.mxu0 %v720
      %v1150 = vpop.f32.mrf.mxu0
      %v1151 = vadd.f32 %v1086, %v1150
      %1152 = vmatmul.f32.gmra.mxu0 %v721
      %v1153 = vpop.f32.mrf.mxu0
      %v1154 = vadd.f32 %v1089, %v1153
      %1155 = vmatmul.f32.gmra.mxu0 %v722
      %v1156 = vpop.f32.mrf.mxu0
      %v1157 = vadd.f32 %v1092, %v1156
      %1158 = vmatmul.f32.gmra.mxu0 %v723
      %v1159 = vpop.f32.mrf.mxu0
      %v1160 = vadd.f32 %v1095, %v1159
      %1161 = vdwg.mxu0
      %1178 = vrot.lane.b32.xlu0 %v931, 96
      %v1179 = vpop.permute.xlu0 %1178
      %1180 = vrot.lane.b32.xlu0 %v934, 96
      %v1181 = vpop.permute.xlu0 %1180
      %1182 = vrot.lane.b32.xlu0 %v937, 96
      %v1183 = vpop.permute.xlu0 %1182
      %1184 = vrot.lane.b32.xlu0 %v940, 96
      %v1185 = vpop.permute.xlu0 %1184
      %1186 = vrot.lane.b32.xlu0 %v943, 96
      %v1187 = vpop.permute.xlu0 %1186
      %1188 = vrot.lane.b32.xlu0 %v946, 96
      %v1189 = vpop.permute.xlu0 %1188
      %1190 = vrot.lane.b32.xlu0 %v949, 96
      %v1191 = vpop.permute.xlu0 %1190
      %1192 = vrot.lane.b32.xlu0 %v952, 96
      %v1193 = vpop.permute.xlu0 %1192
      %1194 = vrot.lane.b32.xlu0 %v955, 96
      %v1195 = vpop.permute.xlu0 %1194
      %1196 = vrot.lane.b32.xlu0 %v958, 96
      %v1197 = vpop.permute.xlu0 %1196
      %1198 = vrot.lane.b32.xlu0 %v961, 96
      %v1199 = vpop.permute.xlu0 %1198
      %1200 = vrot.lane.b32.xlu0 %v964, 96
      %v1201 = vpop.permute.xlu0 %1200
      %1202 = vrot.lane.b32.xlu0 %v967, 96
      %v1203 = vpop.permute.xlu0 %1202
      %1204 = vrot.lane.b32.xlu0 %v970, 96
      %v1205 = vpop.permute.xlu0 %1204
      %1206 = vrot.lane.b32.xlu0 %v973, 96
      %v1207 = vpop.permute.xlu0 %1206
      %1208 = vrot.lane.b32.xlu0 %v976, 96
      %v1209 = vpop.permute.xlu0 %1208
      %v1226 = vadd.f32 %v1115, %v1179
      %v1227 = vadd.f32 %v1118, %v1181
      %v1228 = vadd.f32 %v1121, %v1183
      %v1229 = vadd.f32 %v1124, %v1185
      %v1230 = vadd.f32 %v1127, %v1187
      %v1231 = vadd.f32 %v1130, %v1189
      %v1232 = vadd.f32 %v1133, %v1191
      %v1233 = vadd.f32 %v1136, %v1193
      %v1234 = vadd.f32 %v1139, %v1195
      %v1235 = vadd.f32 %v1142, %v1197
      %v1236 = vadd.f32 %v1145, %v1199
      %v1237 = vadd.f32 %v1148, %v1201
      %v1238 = vadd.f32 %v1151, %v1203
      %v1239 = vadd.f32 %v1154, %v1205
      %v1240 = vadd.f32 %v1157, %v1207
      %v1241 = vadd.f32 %v1160, %v1209
      %v1242 = vld [vmem:[%s9] sm:$0x1]
      %v1244 = vperm.slane %v1242, 0
      %v1246 = vadd.f32 %v1226, %v1244
      %v1247 = vadd.f32 %v1227, %v1244
      %v1248 = vadd.f32 %v1228, %v1244
      %v1249 = vadd.f32 %v1229, %v1244
      %v1250 = vadd.f32 %v1230, %v1244
      %v1251 = vadd.f32 %v1231, %v1244
      %v1252 = vadd.f32 %v1232, %v1244
      %v1253 = vadd.f32 %v1233, %v1244
      %v1254 = vadd.f32 %v1234, %v1244
      %v1255 = vadd.f32 %v1235, %v1244
      %v1256 = vadd.f32 %v1236, %v1244
      %v1257 = vadd.f32 %v1237, %v1244
      %v1258 = vadd.f32 %v1238, %v1244
      %v1259 = vadd.f32 %v1239, %v1244
      %v1260 = vadd.f32 %v1240, %v1244
      %v1261 = vadd.f32 %v1241, %v1244
      %v1262 = vmul.f32 %v1246, %v1246
      %v1263 = vmul.f32 %v1247, %v1247
      %v1264 = vmul.f32 %v1248, %v1248
      %v1265 = vmul.f32 %v1249, %v1249
      %v1266 = vmul.f32 %v1250, %v1250
      %v1267 = vmul.f32 %v1251, %v1251
      %v1268 = vmul.f32 %v1252, %v1252
      %v1269 = vmul.f32 %v1253, %v1253
      %v1270 = vmul.f32 %v1254, %v1254
      %v1271 = vmul.f32 %v1255, %v1255
      %v1272 = vmul.f32 %v1256, %v1256
      %v1273 = vmul.f32 %v1257, %v1257
      %v1274 = vmul.f32 %v1258, %v1258
      %v1275 = vmul.f32 %v1259, %v1259
      %v1276 = vmul.f32 %v1260, %v1260
      %v1277 = vmul.f32 %v1261, %v1261
      %v1278 = vsel %vm864, %v1262, 0.0
      %1279 = vadd.xlane.f32.xlu0 %v1278
      %v1280 = vpop.xlane.xlu0 %1279
      %v1281 = vsel %vm864, %v1263, 0.0
      %1282 = vadd.xlane.f32.xlu0 %v1281
      %v1283 = vpop.xlane.xlu0 %1282
      %v1284 = vsel %vm864, %v1264, 0.0
      %1285 = vadd.xlane.f32.xlu0 %v1284
      %v1286 = vpop.xlane.xlu0 %1285
      %v1287 = vsel %vm864, %v1265, 0.0
      %1288 = vadd.xlane.f32.xlu0 %v1287
      %v1289 = vpop.xlane.xlu0 %1288
      %v1290 = vsel %vm864, %v1266, 0.0
      %1291 = vadd.xlane.f32.xlu0 %v1290
      %v1292 = vpop.xlane.xlu0 %1291
      %v1293 = vsel %vm864, %v1267, 0.0
      %1294 = vadd.xlane.f32.xlu0 %v1293
      %v1295 = vpop.xlane.xlu0 %1294
      %v1296 = vsel %vm864, %v1268, 0.0
      %1297 = vadd.xlane.f32.xlu0 %v1296
      %v1298 = vpop.xlane.xlu0 %1297
      %v1299 = vsel %vm864, %v1269, 0.0
      %1300 = vadd.xlane.f32.xlu0 %v1299
      %v1301 = vpop.xlane.xlu0 %1300
      %v1302 = vsel %vm864, %v1270, 0.0
      %1303 = vadd.xlane.f32.xlu0 %v1302
      %v1304 = vpop.xlane.xlu0 %1303
      %v1305 = vsel %vm864, %v1271, 0.0
      %1306 = vadd.xlane.f32.xlu0 %v1305
      %v1307 = vpop.xlane.xlu0 %1306
      %v1308 = vsel %vm864, %v1272, 0.0
      %1309 = vadd.xlane.f32.xlu0 %v1308
      %v1310 = vpop.xlane.xlu0 %1309
      %v1311 = vsel %vm864, %v1273, 0.0
      %1312 = vadd.xlane.f32.xlu0 %v1311
      %v1313 = vpop.xlane.xlu0 %1312
      %v1314 = vsel %vm864, %v1274, 0.0
      %1315 = vadd.xlane.f32.xlu0 %v1314
      %v1316 = vpop.xlane.xlu0 %1315
      %v1317 = vsel %vm864, %v1275, 0.0
      %1318 = vadd.xlane.f32.xlu0 %v1317
      %v1319 = vpop.xlane.xlu0 %1318
      %v1320 = vsel %vm864, %v1276, 0.0
      %1321 = vadd.xlane.f32.xlu0 %v1320
      %v1322 = vpop.xlane.xlu0 %1321
      %v1323 = vsel %vm864, %v1277, 0.0
      %1324 = vadd.xlane.f32.xlu0 %v1323
      %v1325 = vpop.xlane.xlu0 %1324
      %v1326 = vmax.f32 %v1280, 1e-24
      %v1327 = vmax.f32 %v1283, 1e-24
      %v1328 = vmax.f32 %v1286, 1e-24
      %v1329 = vmax.f32 %v1289, 1e-24
      %v1330 = vmax.f32 %v1292, 1e-24
      %v1331 = vmax.f32 %v1295, 1e-24
      %v1332 = vmax.f32 %v1298, 1e-24
      %v1333 = vmax.f32 %v1301, 1e-24
      %v1334 = vmax.f32 %v1304, 1e-24
      %v1335 = vmax.f32 %v1307, 1e-24
      %v1336 = vmax.f32 %v1310, 1e-24
      %v1337 = vmax.f32 %v1313, 1e-24
      %v1338 = vmax.f32 %v1316, 1e-24
      %v1339 = vmax.f32 %v1319, 1e-24
      %v1340 = vmax.f32 %v1322, 1e-24
      %v1341 = vmax.f32 %v1325, 1e-24
      %v1342 = vrsqrt.pop %v1326
      %v1343 = vmul.f32 %v1342, %v1326
      %v1344 = vmul.f32 %v1343, %v1342
      %v1345 = vmul.f32 0.5, %v1344
      %v1346 = vsub.f32 1.5, %v1345
      %v1347 = vmul.f32 %v1342, %v1346
      %vm1348 = vweird.f32 %v1326
      %vm1349 = vweird.f32 %v1342
      %vm1350 = vmor %vm1348, %vm1349
      %v1351 = vsel %vm1350, %v1342, %v1347
      %v1352 = vrsqrt.pop %v1327
      %v1353 = vmul.f32 %v1352, %v1327
      %v1354 = vmul.f32 %v1353, %v1352
      %v1355 = vmul.f32 0.5, %v1354
      %v1356 = vsub.f32 1.5, %v1355
      %v1357 = vmul.f32 %v1352, %v1356
      %vm1358 = vweird.f32 %v1327
      %vm1359 = vweird.f32 %v1352
      %vm1360 = vmor %vm1358, %vm1359
      %v1361 = vsel %vm1360, %v1352, %v1357
      %v1362 = vrsqrt.pop %v1328
      %v1363 = vmul.f32 %v1362, %v1328
      %v1364 = vmul.f32 %v1363, %v1362
      %v1365 = vmul.f32 0.5, %v1364
      %v1366 = vsub.f32 1.5, %v1365
      %v1367 = vmul.f32 %v1362, %v1366
      %vm1368 = vweird.f32 %v1328
      %vm1369 = vweird.f32 %v1362
      %vm1370 = vmor %vm1368, %vm1369
      %v1371 = vsel %vm1370, %v1362, %v1367
      %v1372 = vrsqrt.pop %v1329
      %v1373 = vmul.f32 %v1372, %v1329
      %v1374 = vmul.f32 %v1373, %v1372
      %v1375 = vmul.f32 0.5, %v1374
      %v1376 = vsub.f32 1.5, %v1375
      %v1377 = vmul.f32 %v1372, %v1376
      %vm1378 = vweird.f32 %v1329
      %vm1379 = vweird.f32 %v1372
      %vm1380 = vmor %vm1378, %vm1379
      %v1381 = vsel %vm1380, %v1372, %v1377
      %v1382 = vrsqrt.pop %v1330
      %v1383 = vmul.f32 %v1382, %v1330
      %v1384 = vmul.f32 %v1383, %v1382
      %v1385 = vmul.f32 0.5, %v1384
      %v1386 = vsub.f32 1.5, %v1385
      %v1387 = vmul.f32 %v1382, %v1386
      %vm1388 = vweird.f32 %v1330
      %vm1389 = vweird.f32 %v1382
      %vm1390 = vmor %vm1388, %vm1389
      %v1391 = vsel %vm1390, %v1382, %v1387
      %v1392 = vrsqrt.pop %v1331
      %v1393 = vmul.f32 %v1392, %v1331
      %v1394 = vmul.f32 %v1393, %v1392
      %v1395 = vmul.f32 0.5, %v1394
      %v1396 = vsub.f32 1.5, %v1395
      %v1397 = vmul.f32 %v1392, %v1396
      %vm1398 = vweird.f32 %v1331
      %vm1399 = vweird.f32 %v1392
      %vm1400 = vmor %vm1398, %vm1399
      %v1401 = vsel %vm1400, %v1392, %v1397
      %v1402 = vrsqrt.pop %v1332
      %v1403 = vmul.f32 %v1402, %v1332
      %v1404 = vmul.f32 %v1403, %v1402
      %v1405 = vmul.f32 0.5, %v1404
      %v1406 = vsub.f32 1.5, %v1405
      %v1407 = vmul.f32 %v1402, %v1406
      %vm1408 = vweird.f32 %v1332
      %vm1409 = vweird.f32 %v1402
      %vm1410 = vmor %vm1408, %vm1409
      %v1411 = vsel %vm1410, %v1402, %v1407
      %v1412 = vrsqrt.pop %v1333
      %v1413 = vmul.f32 %v1412, %v1333
      %v1414 = vmul.f32 %v1413, %v1412
      %v1415 = vmul.f32 0.5, %v1414
      %v1416 = vsub.f32 1.5, %v1415
      %v1417 = vmul.f32 %v1412, %v1416
      %vm1418 = vweird.f32 %v1333
      %vm1419 = vweird.f32 %v1412
      %vm1420 = vmor %vm1418, %vm1419
      %v1421 = vsel %vm1420, %v1412, %v1417
      %v1422 = vrsqrt.pop %v1334
      %v1423 = vmul.f32 %v1422, %v1334
      %v1424 = vmul.f32 %v1423, %v1422
      %v1425 = vmul.f32 0.5, %v1424
      %v1426 = vsub.f32 1.5, %v1425
      %v1427 = vmul.f32 %v1422, %v1426
      %vm1428 = vweird.f32 %v1334
      %vm1429 = vweird.f32 %v1422
      %vm1430 = vmor %vm1428, %vm1429
      %v1431 = vsel %vm1430, %v1422, %v1427
      %v1432 = vrsqrt.pop %v1335
      %v1433 = vmul.f32 %v1432, %v1335
      %v1434 = vmul.f32 %v1433, %v1432
      %v1435 = vmul.f32 0.5, %v1434
      %v1436 = vsub.f32 1.5, %v1435
      %v1437 = vmul.f32 %v1432, %v1436
      %vm1438 = vweird.f32 %v1335
      %vm1439 = vweird.f32 %v1432
      %vm1440 = vmor %vm1438, %vm1439
      %v1441 = vsel %vm1440, %v1432, %v1437
      %v1442 = vrsqrt.pop %v1336
      %v1443 = vmul.f32 %v1442, %v1336
      %v1444 = vmul.f32 %v1443, %v1442
      %v1445 = vmul.f32 0.5, %v1444
      %v1446 = vsub.f32 1.5, %v1445
      %v1447 = vmul.f32 %v1442, %v1446
      %vm1448 = vweird.f32 %v1336
      %vm1449 = vweird.f32 %v1442
      %vm1450 = vmor %vm1448, %vm1449
      %v1451 = vsel %vm1450, %v1442, %v1447
      %v1452 = vrsqrt.pop %v1337
      %v1453 = vmul.f32 %v1452, %v1337
      %v1454 = vmul.f32 %v1453, %v1452
      %v1455 = vmul.f32 0.5, %v1454
      %v1456 = vsub.f32 1.5, %v1455
      %v1457 = vmul.f32 %v1452, %v1456
      %vm1458 = vweird.f32 %v1337
      %vm1459 = vweird.f32 %v1452
      %vm1460 = vmor %vm1458, %vm1459
      %v1461 = vsel %vm1460, %v1452, %v1457
      %v1462 = vrsqrt.pop %v1338
      %v1463 = vmul.f32 %v1462, %v1338
      %v1464 = vmul.f32 %v1463, %v1462
      %v1465 = vmul.f32 0.5, %v1464
      %v1466 = vsub.f32 1.5, %v1465
      %v1467 = vmul.f32 %v1462, %v1466
      %vm1468 = vweird.f32 %v1338
      %vm1469 = vweird.f32 %v1462
      %vm1470 = vmor %vm1468, %vm1469
      %v1471 = vsel %vm1470, %v1462, %v1467
      %v1472 = vrsqrt.pop %v1339
      %v1473 = vmul.f32 %v1472, %v1339
      %v1474 = vmul.f32 %v1473, %v1472
      %v1475 = vmul.f32 0.5, %v1474
      %v1476 = vsub.f32 1.5, %v1475
      %v1477 = vmul.f32 %v1472, %v1476
      %vm1478 = vweird.f32 %v1339
      %vm1479 = vweird.f32 %v1472
      %vm1480 = vmor %vm1478, %vm1479
      %v1481 = vsel %vm1480, %v1472, %v1477
      %v1482 = vrsqrt.pop %v1340
      %v1483 = vmul.f32 %v1482, %v1340
      %v1484 = vmul.f32 %v1483, %v1482
      %v1485 = vmul.f32 0.5, %v1484
      %v1486 = vsub.f32 1.5, %v1485
      %v1487 = vmul.f32 %v1482, %v1486
      %vm1488 = vweird.f32 %v1340
      %vm1489 = vweird.f32 %v1482
      %vm1490 = vmor %vm1488, %vm1489
      %v1491 = vsel %vm1490, %v1482, %v1487
      %v1492 = vrsqrt.pop %v1341
      %v1493 = vmul.f32 %v1492, %v1341
      %v1494 = vmul.f32 %v1493, %v1492
      %v1495 = vmul.f32 0.5, %v1494
      %v1496 = vsub.f32 1.5, %v1495
      %v1497 = vmul.f32 %v1492, %v1496
      %vm1498 = vweird.f32 %v1341
      %vm1499 = vweird.f32 %v1492
      %vm1500 = vmor %vm1498, %vm1499
      %v1501 = vsel %vm1500, %v1492, %v1497
      %v1502 = vmul.f32 %v1246, %v1351
      %v1503 = vmul.f32 %v1247, %v1361
      %v1504 = vmul.f32 %v1248, %v1371
      %v1505 = vmul.f32 %v1249, %v1381
      %v1506 = vmul.f32 %v1250, %v1391
      %v1507 = vmul.f32 %v1251, %v1401
      %v1508 = vmul.f32 %v1252, %v1411
      %v1509 = vmul.f32 %v1253, %v1421
      %v1510 = vmul.f32 %v1254, %v1431
      %v1511 = vmul.f32 %v1255, %v1441
      %v1512 = vmul.f32 %v1256, %v1451
      %v1513 = vmul.f32 %v1257, %v1461
      %v1514 = vmul.f32 %v1258, %v1471
      %v1515 = vmul.f32 %v1259, %v1481
      %v1516 = vmul.f32 %v1260, %v1491
      %v1517 = vmul.f32 %v1261, %v1501
      %v1518 = vmax.f32 %v1502, 0.0
      %v1519 = vmax.f32 %v1503, 0.0
      %v1520 = vmax.f32 %v1504, 0.0
      %v1521 = vmax.f32 %v1505, 0.0
      %v1522 = vmax.f32 %v1506, 0.0
      %v1523 = vmax.f32 %v1507, 0.0
      %v1524 = vmax.f32 %v1508, 0.0
      %v1525 = vmax.f32 %v1509, 0.0
      %v1526 = vmax.f32 %v1510, 0.0
      %v1527 = vmax.f32 %v1511, 0.0
      %v1528 = vmax.f32 %v1512, 0.0
      %v1529 = vmax.f32 %v1513, 0.0
      %v1530 = vmax.f32 %v1514, 0.0
      %v1531 = vmax.f32 %v1515, 0.0
      %v1532 = vmax.f32 %v1516, 0.0
      %v1533 = vmax.f32 %v1517, 0.0
      %s1534 = scalar_lea.vmem %s7, 32
      %v1535 = vld [vmem:[%s1534] sm:$0xff]
      %v1536 = vld [vmem:[%s1534 + $0x8] sm:$0xff]
      %v1537 = vld [vmem:[%s1534 + $0x10] sm:$0xff]
      %v1538 = vld [vmem:[%s1534 + $0x18] sm:$0xff]
      %v1540 = vsel %vm864, %v1518, 0
      %v1543 = vsel %vm864, %v1519, 0
      %v1546 = vsel %vm864, %v1520, 0
      %v1549 = vsel %vm864, %v1521, 0
      %v1552 = vsel %vm864, %v1522, 0
      %v1555 = vsel %vm864, %v1523, 0
      %v1558 = vsel %vm864, %v1524, 0
      %v1561 = vsel %vm864, %v1525, 0
      %v1564 = vsel %vm864, %v1526, 0
      %v1567 = vsel %vm864, %v1527, 0
      %v1570 = vsel %vm864, %v1528, 0
      %v1573 = vsel %vm864, %v1529, 0
      %v1576 = vsel %vm864, %v1530, 0
      %v1579 = vsel %vm864, %v1531, 0
      %v1582 = vsel %vm864, %v1532, 0
      %v1585 = vsel %vm864, %v1533, 0
      %1587 = vmatpush.msra.mxu0 0.0
      %1588 = vmatpush.msra.mxu0 0.0
      %1589 = vmatpush.msra.mxu0 0.0
      %1590 = vmatpush.msra.mxu0 0.0
      %1591 = vmatpush.msra.mxu0 0.0
      %1592 = vmatpush.msra.mxu0 0.0
      %1593 = vmatpush.msra.mxu0 0.0
      %1594 = vmatpush.msra.mxu0 0.0
      %1595 = vmatpush.msra.mxu0 0.0
      %1596 = vmatpush.msra.mxu0 0.0
      %1597 = vmatpush.msra.mxu0 0.0
      %1598 = vmatpush.msra.mxu0 0.0
      %1599 = vmatpush.msra.mxu0 %v1538
      %1600 = vmatpush.msra.mxu0 %v1537
      %1601 = vmatpush.msra.mxu0 %v1536
      %1602 = vmatpush.msra.mxu0 %v1535
      %1603 = vmatmul.f32.gmra.mxu0 %v1540
      %v1604 = vpop.f32.mrf.mxu0
      %v1605 = vadd.f32 0.0, %v1604
      %1606 = vmatmul.f32.gmra.mxu0 %v1543
      %v1607 = vpop.f32.mrf.mxu0
      %v1608 = vadd.f32 0.0, %v1607
      %1609 = vmatmul.f32.gmra.mxu0 %v1546
      %v1610 = vpop.f32.mrf.mxu0
      %v1611 = vadd.f32 0.0, %v1610
      %1612 = vmatmul.f32.gmra.mxu0 %v1549
      %v1613 = vpop.f32.mrf.mxu0
      %v1614 = vadd.f32 0.0, %v1613
      %1615 = vmatmul.f32.gmra.mxu0 %v1552
      %v1616 = vpop.f32.mrf.mxu0
      %v1617 = vadd.f32 0.0, %v1616
      %1618 = vmatmul.f32.gmra.mxu0 %v1555
      %v1619 = vpop.f32.mrf.mxu0
      %v1620 = vadd.f32 0.0, %v1619
      %1621 = vmatmul.f32.gmra.mxu0 %v1558
      %v1622 = vpop.f32.mrf.mxu0
      %v1623 = vadd.f32 0.0, %v1622
      %1624 = vmatmul.f32.gmra.mxu0 %v1561
      %v1625 = vpop.f32.mrf.mxu0
      %v1626 = vadd.f32 0.0, %v1625
      %1627 = vmatmul.f32.gmra.mxu0 %v1564
      %v1628 = vpop.f32.mrf.mxu0
      %v1629 = vadd.f32 0.0, %v1628
      %1630 = vmatmul.f32.gmra.mxu0 %v1567
      %v1631 = vpop.f32.mrf.mxu0
      %v1632 = vadd.f32 0.0, %v1631
      %1633 = vmatmul.f32.gmra.mxu0 %v1570
      %v1634 = vpop.f32.mrf.mxu0
      %v1635 = vadd.f32 0.0, %v1634
      %1636 = vmatmul.f32.gmra.mxu0 %v1573
      %v1637 = vpop.f32.mrf.mxu0
      %v1638 = vadd.f32 0.0, %v1637
      %1639 = vmatmul.f32.gmra.mxu0 %v1576
      %v1640 = vpop.f32.mrf.mxu0
      %v1641 = vadd.f32 0.0, %v1640
      %1642 = vmatmul.f32.gmra.mxu0 %v1579
      %v1643 = vpop.f32.mrf.mxu0
      %v1644 = vadd.f32 0.0, %v1643
      %1645 = vmatmul.f32.gmra.mxu0 %v1582
      %v1646 = vpop.f32.mrf.mxu0
      %v1647 = vadd.f32 0.0, %v1646
      %1648 = vmatmul.f32.gmra.mxu0 %v1585
      %v1649 = vpop.f32.mrf.mxu0
      %v1650 = vadd.f32 0.0, %v1649
      %1651 = vdwg.mxu0
      %s1652 = scalar_lea.vmem %s8, 4
      %v1653 = vld [vmem:[%s1652] sm:$0xf]
      %v1655 = vsel %vm1028, %v1653, 0
      %1657 = vmatpush.msra.mxu0 0.0
      %1658 = vmatpush.msra.mxu0 0.0
      %1659 = vmatpush.msra.mxu0 0.0
      %1660 = vmatpush.msra.mxu0 0.0
      %1661 = vmatpush.msra.mxu0 0.0
      %1662 = vmatpush.msra.mxu0 0.0
      %1663 = vmatpush.msra.mxu0 0.0
      %1664 = vmatpush.msra.mxu0 0.0
      %1665 = vmatpush.msra.mxu0 0.0
      %1666 = vmatpush.msra.mxu0 0.0
      %1667 = vmatpush.msra.mxu0 0.0
      %1668 = vmatpush.msra.mxu0 0.0
      %1669 = vmatpush.msra.mxu0 0.0
      %1670 = vmatpush.msra.mxu0 0.0
      %1671 = vmatpush.msra.mxu0 0.0
      %1672 = vmatpush.msra.mxu0 %v1655
      %1673 = vmatmul.f32.gmra.mxu0 %v981
      %v1674 = vpop.f32.mrf.mxu0
      %v1675 = vadd.f32 0.0, %v1674
      %1676 = vmatmul.f32.gmra.mxu0 %v984
      %v1677 = vpop.f32.mrf.mxu0
      %v1678 = vadd.f32 0.0, %v1677
      %1679 = vmatmul.f32.gmra.mxu0 %v987
      %v1680 = vpop.f32.mrf.mxu0
      %v1681 = vadd.f32 0.0, %v1680
      %1682 = vmatmul.f32.gmra.mxu0 %v990
      %v1683 = vpop.f32.mrf.mxu0
      %v1684 = vadd.f32 0.0, %v1683
      %1685 = vmatmul.f32.gmra.mxu0 %v993
      %v1686 = vpop.f32.mrf.mxu0
      %v1687 = vadd.f32 0.0, %v1686
      %1688 = vmatmul.f32.gmra.mxu0 %v996
      %v1689 = vpop.f32.mrf.mxu0
      %v1690 = vadd.f32 0.0, %v1689
      %1691 = vmatmul.f32.gmra.mxu0 %v999
      %v1692 = vpop.f32.mrf.mxu0
      %v1693 = vadd.f32 0.0, %v1692
      %1694 = vmatmul.f32.gmra.mxu0 %v1002
      %v1695 = vpop.f32.mrf.mxu0
      %v1696 = vadd.f32 0.0, %v1695
      %1697 = vmatmul.f32.gmra.mxu0 %v1005
      %v1698 = vpop.f32.mrf.mxu0
      %v1699 = vadd.f32 0.0, %v1698
      %1700 = vmatmul.f32.gmra.mxu0 %v1008
      %v1701 = vpop.f32.mrf.mxu0
      %v1702 = vadd.f32 0.0, %v1701
      %1703 = vmatmul.f32.gmra.mxu0 %v1011
      %v1704 = vpop.f32.mrf.mxu0
      %v1705 = vadd.f32 0.0, %v1704
      %1706 = vmatmul.f32.gmra.mxu0 %v1014
      %v1707 = vpop.f32.mrf.mxu0
      %v1708 = vadd.f32 0.0, %v1707
      %1709 = vmatmul.f32.gmra.mxu0 %v1017
      %v1710 = vpop.f32.mrf.mxu0
      %v1711 = vadd.f32 0.0, %v1710
      %1712 = vmatmul.f32.gmra.mxu0 %v1020
      %v1713 = vpop.f32.mrf.mxu0
      %v1714 = vadd.f32 0.0, %v1713
      %1715 = vmatmul.f32.gmra.mxu0 %v1023
      %v1716 = vpop.f32.mrf.mxu0
      %v1717 = vadd.f32 0.0, %v1716
      %1718 = vmatmul.f32.gmra.mxu0 %v1026
      %v1719 = vpop.f32.mrf.mxu0
      %v1720 = vadd.f32 0.0, %v1719
      %1721 = vdwg.mxu0
      %1722 = vmatpush.msra.mxu0 %v1650
      %1723 = vmatpush.msra.mxu0 %v1647
      %1724 = vmatpush.msra.mxu0 %v1644
      %1725 = vmatpush.msra.mxu0 %v1641
      %1726 = vmatpush.msra.mxu0 %v1638
      %1727 = vmatpush.msra.mxu0 %v1635
      %1728 = vmatpush.msra.mxu0 %v1632
      %1729 = vmatpush.msra.mxu0 %v1629
      %1730 = vmatpush.msra.mxu0 %v1626
      %1731 = vmatpush.msra.mxu0 %v1623
      %1732 = vmatpush.msra.mxu0 %v1620
      %1733 = vmatpush.msra.mxu0 %v1617
      %1734 = vmatpush.msra.mxu0 %v1614
      %1735 = vmatpush.msra.mxu0 %v1611
      %1736 = vmatpush.msra.mxu0 %v1608
      %1737 = vmatpush.msra.mxu0 %v1605
      %1738 = vmatmul.f32.gmra.mxu0 %v708
      %v1739 = vpop.f32.mrf.mxu0
      %v1740 = vadd.f32 %v1675, %v1739
      %1741 = vmatmul.f32.gmra.mxu0 %v709
      %v1742 = vpop.f32.mrf.mxu0
      %v1743 = vadd.f32 %v1678, %v1742
      %1744 = vmatmul.f32.gmra.mxu0 %v710
      %v1745 = vpop.f32.mrf.mxu0
      %v1746 = vadd.f32 %v1681, %v1745
      %1747 = vmatmul.f32.gmra.mxu0 %v711
      %v1748 = vpop.f32.mrf.mxu0
      %v1749 = vadd.f32 %v1684, %v1748
      %1750 = vmatmul.f32.gmra.mxu0 %v712
      %v1751 = vpop.f32.mrf.mxu0
      %v1752 = vadd.f32 %v1687, %v1751
      %1753 = vmatmul.f32.gmra.mxu0 %v713
      %v1754 = vpop.f32.mrf.mxu0
      %v1755 = vadd.f32 %v1690, %v1754
      %1756 = vmatmul.f32.gmra.mxu0 %v714
      %v1757 = vpop.f32.mrf.mxu0
      %v1758 = vadd.f32 %v1693, %v1757
      %1759 = vmatmul.f32.gmra.mxu0 %v715
      %v1760 = vpop.f32.mrf.mxu0
      %v1761 = vadd.f32 %v1696, %v1760
      %1762 = vmatmul.f32.gmra.mxu0 %v716
      %v1763 = vpop.f32.mrf.mxu0
      %v1764 = vadd.f32 %v1699, %v1763
      %1765 = vmatmul.f32.gmra.mxu0 %v717
      %v1766 = vpop.f32.mrf.mxu0
      %v1767 = vadd.f32 %v1702, %v1766
      %1768 = vmatmul.f32.gmra.mxu0 %v718
      %v1769 = vpop.f32.mrf.mxu0
      %v1770 = vadd.f32 %v1705, %v1769
      %1771 = vmatmul.f32.gmra.mxu0 %v719
      %v1772 = vpop.f32.mrf.mxu0
      %v1773 = vadd.f32 %v1708, %v1772
      %1774 = vmatmul.f32.gmra.mxu0 %v720
      %v1775 = vpop.f32.mrf.mxu0
      %v1776 = vadd.f32 %v1711, %v1775
      %1777 = vmatmul.f32.gmra.mxu0 %v721
      %v1778 = vpop.f32.mrf.mxu0
      %v1779 = vadd.f32 %v1714, %v1778
      %1780 = vmatmul.f32.gmra.mxu0 %v722
      %v1781 = vpop.f32.mrf.mxu0
      %v1782 = vadd.f32 %v1717, %v1781
      %1783 = vmatmul.f32.gmra.mxu0 %v723
      %v1784 = vpop.f32.mrf.mxu0
      %v1785 = vadd.f32 %v1720, %v1784
      %1786 = vdwg.mxu0
      %1803 = vrot.lane.b32.xlu0 %v1605, 96
      %v1804 = vpop.permute.xlu0 %1803
      %1805 = vrot.lane.b32.xlu0 %v1608, 96
      %v1806 = vpop.permute.xlu0 %1805
      %1807 = vrot.lane.b32.xlu0 %v1611, 96
      %v1808 = vpop.permute.xlu0 %1807
      %1809 = vrot.lane.b32.xlu0 %v1614, 96
      %v1810 = vpop.permute.xlu0 %1809
      %1811 = vrot.lane.b32.xlu0 %v1617, 96
      %v1812 = vpop.permute.xlu0 %1811
      %1813 = vrot.lane.b32.xlu0 %v1620, 96
      %v1814 = vpop.permute.xlu0 %1813
      %1815 = vrot.lane.b32.xlu0 %v1623, 96
      %v1816 = vpop.permute.xlu0 %1815
      %1817 = vrot.lane.b32.xlu0 %v1626, 96
      %v1818 = vpop.permute.xlu0 %1817
      %1819 = vrot.lane.b32.xlu0 %v1629, 96
      %v1820 = vpop.permute.xlu0 %1819
      %1821 = vrot.lane.b32.xlu0 %v1632, 96
      %v1822 = vpop.permute.xlu0 %1821
      %1823 = vrot.lane.b32.xlu0 %v1635, 96
      %v1824 = vpop.permute.xlu0 %1823
      %1825 = vrot.lane.b32.xlu0 %v1638, 96
      %v1826 = vpop.permute.xlu0 %1825
      %1827 = vrot.lane.b32.xlu0 %v1641, 96
      %v1828 = vpop.permute.xlu0 %1827
      %1829 = vrot.lane.b32.xlu0 %v1644, 96
      %v1830 = vpop.permute.xlu0 %1829
      %1831 = vrot.lane.b32.xlu0 %v1647, 96
      %v1832 = vpop.permute.xlu0 %1831
      %1833 = vrot.lane.b32.xlu0 %v1650, 96
      %v1834 = vpop.permute.xlu0 %1833
      %v1851 = vadd.f32 %v1740, %v1804
      %v1852 = vadd.f32 %v1743, %v1806
      %v1853 = vadd.f32 %v1746, %v1808
      %v1854 = vadd.f32 %v1749, %v1810
      %v1855 = vadd.f32 %v1752, %v1812
      %v1856 = vadd.f32 %v1755, %v1814
      %v1857 = vadd.f32 %v1758, %v1816
      %v1858 = vadd.f32 %v1761, %v1818
      %v1859 = vadd.f32 %v1764, %v1820
      %v1860 = vadd.f32 %v1767, %v1822
      %v1861 = vadd.f32 %v1770, %v1824
      %v1862 = vadd.f32 %v1773, %v1826
      %v1863 = vadd.f32 %v1776, %v1828
      %v1864 = vadd.f32 %v1779, %v1830
      %v1865 = vadd.f32 %v1782, %v1832
      %v1866 = vadd.f32 %v1785, %v1834
      %s1867 = scalar_lea.vmem %s9, 1
      %v1868 = vld [vmem:[%s1867] sm:$0x1]
      %v1870 = vperm.slane %v1868, 0
      %v1872 = vadd.f32 %v1851, %v1870
      %v1873 = vadd.f32 %v1852, %v1870
      %v1874 = vadd.f32 %v1853, %v1870
      %v1875 = vadd.f32 %v1854, %v1870
      %v1876 = vadd.f32 %v1855, %v1870
      %v1877 = vadd.f32 %v1856, %v1870
      %v1878 = vadd.f32 %v1857, %v1870
      %v1879 = vadd.f32 %v1858, %v1870
      %v1880 = vadd.f32 %v1859, %v1870
      %v1881 = vadd.f32 %v1860, %v1870
      %v1882 = vadd.f32 %v1861, %v1870
      %v1883 = vadd.f32 %v1862, %v1870
      %v1884 = vadd.f32 %v1863, %v1870
      %v1885 = vadd.f32 %v1864, %v1870
      %v1886 = vadd.f32 %v1865, %v1870
      %v1887 = vadd.f32 %v1866, %v1870
      %v1888 = vmul.f32 %v1872, %v1872
      %v1889 = vmul.f32 %v1873, %v1873
      %v1890 = vmul.f32 %v1874, %v1874
      %v1891 = vmul.f32 %v1875, %v1875
      %v1892 = vmul.f32 %v1876, %v1876
      %v1893 = vmul.f32 %v1877, %v1877
      %v1894 = vmul.f32 %v1878, %v1878
      %v1895 = vmul.f32 %v1879, %v1879
      %v1896 = vmul.f32 %v1880, %v1880
      %v1897 = vmul.f32 %v1881, %v1881
      %v1898 = vmul.f32 %v1882, %v1882
      %v1899 = vmul.f32 %v1883, %v1883
      %v1900 = vmul.f32 %v1884, %v1884
      %v1901 = vmul.f32 %v1885, %v1885
      %v1902 = vmul.f32 %v1886, %v1886
      %v1903 = vmul.f32 %v1887, %v1887
      %v1904 = vsel %vm864, %v1888, 0.0
      %1905 = vadd.xlane.f32.xlu0 %v1904
      %v1906 = vpop.xlane.xlu0 %1905
      %v1907 = vsel %vm864, %v1889, 0.0
      %1908 = vadd.xlane.f32.xlu0 %v1907
      %v1909 = vpop.xlane.xlu0 %1908
      %v1910 = vsel %vm864, %v1890, 0.0
      %1911 = vadd.xlane.f32.xlu0 %v1910
      %v1912 = vpop.xlane.xlu0 %1911
      %v1913 = vsel %vm864, %v1891, 0.0
      %1914 = vadd.xlane.f32.xlu0 %v1913
      %v1915 = vpop.xlane.xlu0 %1914
      %v1916 = vsel %vm864, %v1892, 0.0
      %1917 = vadd.xlane.f32.xlu0 %v1916
      %v1918 = vpop.xlane.xlu0 %1917
      %v1919 = vsel %vm864, %v1893, 0.0
      %1920 = vadd.xlane.f32.xlu0 %v1919
      %v1921 = vpop.xlane.xlu0 %1920
      %v1922 = vsel %vm864, %v1894, 0.0
      %1923 = vadd.xlane.f32.xlu0 %v1922
      %v1924 = vpop.xlane.xlu0 %1923
      %v1925 = vsel %vm864, %v1895, 0.0
      %1926 = vadd.xlane.f32.xlu0 %v1925
      %v1927 = vpop.xlane.xlu0 %1926
      %v1928 = vsel %vm864, %v1896, 0.0
      %1929 = vadd.xlane.f32.xlu0 %v1928
      %v1930 = vpop.xlane.xlu0 %1929
      %v1931 = vsel %vm864, %v1897, 0.0
      %1932 = vadd.xlane.f32.xlu0 %v1931
      %v1933 = vpop.xlane.xlu0 %1932
      %v1934 = vsel %vm864, %v1898, 0.0
      %1935 = vadd.xlane.f32.xlu0 %v1934
      %v1936 = vpop.xlane.xlu0 %1935
      %v1937 = vsel %vm864, %v1899, 0.0
      %1938 = vadd.xlane.f32.xlu0 %v1937
      %v1939 = vpop.xlane.xlu0 %1938
      %v1940 = vsel %vm864, %v1900, 0.0
      %1941 = vadd.xlane.f32.xlu0 %v1940
      %v1942 = vpop.xlane.xlu0 %1941
      %v1943 = vsel %vm864, %v1901, 0.0
      %1944 = vadd.xlane.f32.xlu0 %v1943
      %v1945 = vpop.xlane.xlu0 %1944
      %v1946 = vsel %vm864, %v1902, 0.0
      %1947 = vadd.xlane.f32.xlu0 %v1946
      %v1948 = vpop.xlane.xlu0 %1947
      %v1949 = vsel %vm864, %v1903, 0.0
      %1950 = vadd.xlane.f32.xlu0 %v1949
      %v1951 = vpop.xlane.xlu0 %1950
      %v1952 = vmax.f32 %v1906, 1e-24
      %v1953 = vmax.f32 %v1909, 1e-24
      %v1954 = vmax.f32 %v1912, 1e-24
      %v1955 = vmax.f32 %v1915, 1e-24
      %v1956 = vmax.f32 %v1918, 1e-24
      %v1957 = vmax.f32 %v1921, 1e-24
      %v1958 = vmax.f32 %v1924, 1e-24
      %v1959 = vmax.f32 %v1927, 1e-24
      %v1960 = vmax.f32 %v1930, 1e-24
      %v1961 = vmax.f32 %v1933, 1e-24
      %v1962 = vmax.f32 %v1936, 1e-24
      %v1963 = vmax.f32 %v1939, 1e-24
      %v1964 = vmax.f32 %v1942, 1e-24
      %v1965 = vmax.f32 %v1945, 1e-24
      %v1966 = vmax.f32 %v1948, 1e-24
      %v1967 = vmax.f32 %v1951, 1e-24
      %v1968 = vrsqrt.pop %v1952
      %v1969 = vmul.f32 %v1968, %v1952
      %v1970 = vmul.f32 %v1969, %v1968
      %v1971 = vmul.f32 0.5, %v1970
      %v1972 = vsub.f32 1.5, %v1971
      %v1973 = vmul.f32 %v1968, %v1972
      %vm1974 = vweird.f32 %v1952
      %vm1975 = vweird.f32 %v1968
      %vm1976 = vmor %vm1974, %vm1975
      %v1977 = vsel %vm1976, %v1968, %v1973
      %v1978 = vrsqrt.pop %v1953
      %v1979 = vmul.f32 %v1978, %v1953
      %v1980 = vmul.f32 %v1979, %v1978
      %v1981 = vmul.f32 0.5, %v1980
      %v1982 = vsub.f32 1.5, %v1981
      %v1983 = vmul.f32 %v1978, %v1982
      %vm1984 = vweird.f32 %v1953
      %vm1985 = vweird.f32 %v1978
      %vm1986 = vmor %vm1984, %vm1985
      %v1987 = vsel %vm1986, %v1978, %v1983
      %v1988 = vrsqrt.pop %v1954
      %v1989 = vmul.f32 %v1988, %v1954
      %v1990 = vmul.f32 %v1989, %v1988
      %v1991 = vmul.f32 0.5, %v1990
      %v1992 = vsub.f32 1.5, %v1991
      %v1993 = vmul.f32 %v1988, %v1992
      %vm1994 = vweird.f32 %v1954
      %vm1995 = vweird.f32 %v1988
      %vm1996 = vmor %vm1994, %vm1995
      %v1997 = vsel %vm1996, %v1988, %v1993
      %v1998 = vrsqrt.pop %v1955
      %v1999 = vmul.f32 %v1998, %v1955
      %v2000 = vmul.f32 %v1999, %v1998
      %v2001 = vmul.f32 0.5, %v2000
      %v2002 = vsub.f32 1.5, %v2001
      %v2003 = vmul.f32 %v1998, %v2002
      %vm2004 = vweird.f32 %v1955
      %vm2005 = vweird.f32 %v1998
      %vm2006 = vmor %vm2004, %vm2005
      %v2007 = vsel %vm2006, %v1998, %v2003
      %v2008 = vrsqrt.pop %v1956
      %v2009 = vmul.f32 %v2008, %v1956
      %v2010 = vmul.f32 %v2009, %v2008
      %v2011 = vmul.f32 0.5, %v2010
      %v2012 = vsub.f32 1.5, %v2011
      %v2013 = vmul.f32 %v2008, %v2012
      %vm2014 = vweird.f32 %v1956
      %vm2015 = vweird.f32 %v2008
      %vm2016 = vmor %vm2014, %vm2015
      %v2017 = vsel %vm2016, %v2008, %v2013
      %v2018 = vrsqrt.pop %v1957
      %v2019 = vmul.f32 %v2018, %v1957
      %v2020 = vmul.f32 %v2019, %v2018
      %v2021 = vmul.f32 0.5, %v2020
      %v2022 = vsub.f32 1.5, %v2021
      %v2023 = vmul.f32 %v2018, %v2022
      %vm2024 = vweird.f32 %v1957
      %vm2025 = vweird.f32 %v2018
      %vm2026 = vmor %vm2024, %vm2025
      %v2027 = vsel %vm2026, %v2018, %v2023
      %v2028 = vrsqrt.pop %v1958
      %v2029 = vmul.f32 %v2028, %v1958
      %v2030 = vmul.f32 %v2029, %v2028
      %v2031 = vmul.f32 0.5, %v2030
      %v2032 = vsub.f32 1.5, %v2031
      %v2033 = vmul.f32 %v2028, %v2032
      %vm2034 = vweird.f32 %v1958
      %vm2035 = vweird.f32 %v2028
      %vm2036 = vmor %vm2034, %vm2035
      %v2037 = vsel %vm2036, %v2028, %v2033
      %v2038 = vrsqrt.pop %v1959
      %v2039 = vmul.f32 %v2038, %v1959
      %v2040 = vmul.f32 %v2039, %v2038
      %v2041 = vmul.f32 0.5, %v2040
      %v2042 = vsub.f32 1.5, %v2041
      %v2043 = vmul.f32 %v2038, %v2042
      %vm2044 = vweird.f32 %v1959
      %vm2045 = vweird.f32 %v2038
      %vm2046 = vmor %vm2044, %vm2045
      %v2047 = vsel %vm2046, %v2038, %v2043
      %v2048 = vrsqrt.pop %v1960
      %v2049 = vmul.f32 %v2048, %v1960
      %v2050 = vmul.f32 %v2049, %v2048
      %v2051 = vmul.f32 0.5, %v2050
      %v2052 = vsub.f32 1.5, %v2051
      %v2053 = vmul.f32 %v2048, %v2052
      %vm2054 = vweird.f32 %v1960
      %vm2055 = vweird.f32 %v2048
      %vm2056 = vmor %vm2054, %vm2055
      %v2057 = vsel %vm2056, %v2048, %v2053
      %v2058 = vrsqrt.pop %v1961
      %v2059 = vmul.f32 %v2058, %v1961
      %v2060 = vmul.f32 %v2059, %v2058
      %v2061 = vmul.f32 0.5, %v2060
      %v2062 = vsub.f32 1.5, %v2061
      %v2063 = vmul.f32 %v2058, %v2062
      %vm2064 = vweird.f32 %v1961
      %vm2065 = vweird.f32 %v2058
      %vm2066 = vmor %vm2064, %vm2065
      %v2067 = vsel %vm2066, %v2058, %v2063
      %v2068 = vrsqrt.pop %v1962
      %v2069 = vmul.f32 %v2068, %v1962
      %v2070 = vmul.f32 %v2069, %v2068
      %v2071 = vmul.f32 0.5, %v2070
      %v2072 = vsub.f32 1.5, %v2071
      %v2073 = vmul.f32 %v2068, %v2072
      %vm2074 = vweird.f32 %v1962
      %vm2075 = vweird.f32 %v2068
      %vm2076 = vmor %vm2074, %vm2075
      %v2077 = vsel %vm2076, %v2068, %v2073
      %v2078 = vrsqrt.pop %v1963
      %v2079 = vmul.f32 %v2078, %v1963
      %v2080 = vmul.f32 %v2079, %v2078
      %v2081 = vmul.f32 0.5, %v2080
      %v2082 = vsub.f32 1.5, %v2081
      %v2083 = vmul.f32 %v2078, %v2082
      %vm2084 = vweird.f32 %v1963
      %vm2085 = vweird.f32 %v2078
      %vm2086 = vmor %vm2084, %vm2085
      %v2087 = vsel %vm2086, %v2078, %v2083
      %v2088 = vrsqrt.pop %v1964
      %v2089 = vmul.f32 %v2088, %v1964
      %v2090 = vmul.f32 %v2089, %v2088
      %v2091 = vmul.f32 0.5, %v2090
      %v2092 = vsub.f32 1.5, %v2091
      %v2093 = vmul.f32 %v2088, %v2092
      %vm2094 = vweird.f32 %v1964
      %vm2095 = vweird.f32 %v2088
      %vm2096 = vmor %vm2094, %vm2095
      %v2097 = vsel %vm2096, %v2088, %v2093
      %v2098 = vrsqrt.pop %v1965
      %v2099 = vmul.f32 %v2098, %v1965
      %v2100 = vmul.f32 %v2099, %v2098
      %v2101 = vmul.f32 0.5, %v2100
      %v2102 = vsub.f32 1.5, %v2101
      %v2103 = vmul.f32 %v2098, %v2102
      %vm2104 = vweird.f32 %v1965
      %vm2105 = vweird.f32 %v2098
      %vm2106 = vmor %vm2104, %vm2105
      %v2107 = vsel %vm2106, %v2098, %v2103
      %v2108 = vrsqrt.pop %v1966
      %v2109 = vmul.f32 %v2108, %v1966
      %v2110 = vmul.f32 %v2109, %v2108
      %v2111 = vmul.f32 0.5, %v2110
      %v2112 = vsub.f32 1.5, %v2111
      %v2113 = vmul.f32 %v2108, %v2112
      %vm2114 = vweird.f32 %v1966
      %vm2115 = vweird.f32 %v2108
      %vm2116 = vmor %vm2114, %vm2115
      %v2117 = vsel %vm2116, %v2108, %v2113
      %v2118 = vrsqrt.pop %v1967
      %v2119 = vmul.f32 %v2118, %v1967
      %v2120 = vmul.f32 %v2119, %v2118
      %v2121 = vmul.f32 0.5, %v2120
      %v2122 = vsub.f32 1.5, %v2121
      %v2123 = vmul.f32 %v2118, %v2122
      %vm2124 = vweird.f32 %v1967
      %vm2125 = vweird.f32 %v2118
      %vm2126 = vmor %vm2124, %vm2125
      %v2127 = vsel %vm2126, %v2118, %v2123
      %v2128 = vmul.f32 %v1872, %v1977
      %v2129 = vmul.f32 %v1873, %v1987
      %v2130 = vmul.f32 %v1874, %v1997
      %v2131 = vmul.f32 %v1875, %v2007
      %v2132 = vmul.f32 %v1876, %v2017
      %v2133 = vmul.f32 %v1877, %v2027
      %v2134 = vmul.f32 %v1878, %v2037
      %v2135 = vmul.f32 %v1879, %v2047
      %v2136 = vmul.f32 %v1880, %v2057
      %v2137 = vmul.f32 %v1881, %v2067
      %v2138 = vmul.f32 %v1882, %v2077
      %v2139 = vmul.f32 %v1883, %v2087
      %v2140 = vmul.f32 %v1884, %v2097
      %v2141 = vmul.f32 %v1885, %v2107
      %v2142 = vmul.f32 %v1886, %v2117
      %v2143 = vmul.f32 %v1887, %v2127
      %v2144 = vmax.f32 %v2128, 0.0
      %v2145 = vmax.f32 %v2129, 0.0
      %v2146 = vmax.f32 %v2130, 0.0
      %v2147 = vmax.f32 %v2131, 0.0
      %v2148 = vmax.f32 %v2132, 0.0
      %v2149 = vmax.f32 %v2133, 0.0
      %v2150 = vmax.f32 %v2134, 0.0
      %v2151 = vmax.f32 %v2135, 0.0
      %v2152 = vmax.f32 %v2136, 0.0
      %v2153 = vmax.f32 %v2137, 0.0
      %v2154 = vmax.f32 %v2138, 0.0
      %v2155 = vmax.f32 %v2139, 0.0
      %v2156 = vmax.f32 %v2140, 0.0
      %v2157 = vmax.f32 %v2141, 0.0
      %v2158 = vmax.f32 %v2142, 0.0
      %v2159 = vmax.f32 %v2143, 0.0
      %2176 = vrot.lane.b32.xlu0 %v2144, 32
      %v2177 = vpop.permute.xlu0 %2176
      %2178 = vrot.lane.b32.xlu0 %v2145, 32
      %v2179 = vpop.permute.xlu0 %2178
      %2180 = vrot.lane.b32.xlu0 %v2146, 32
      %v2181 = vpop.permute.xlu0 %2180
      %2182 = vrot.lane.b32.xlu0 %v2147, 32
      %v2183 = vpop.permute.xlu0 %2182
      %2184 = vrot.lane.b32.xlu0 %v2148, 32
      %v2185 = vpop.permute.xlu0 %2184
      %2186 = vrot.lane.b32.xlu0 %v2149, 32
      %v2187 = vpop.permute.xlu0 %2186
      %2188 = vrot.lane.b32.xlu0 %v2150, 32
      %v2189 = vpop.permute.xlu0 %2188
      %2190 = vrot.lane.b32.xlu0 %v2151, 32
      %v2191 = vpop.permute.xlu0 %2190
      %2192 = vrot.lane.b32.xlu0 %v2152, 32
      %v2193 = vpop.permute.xlu0 %2192
      %2194 = vrot.lane.b32.xlu0 %v2153, 32
      %v2195 = vpop.permute.xlu0 %2194
      %2196 = vrot.lane.b32.xlu0 %v2154, 32
      %v2197 = vpop.permute.xlu0 %2196
      %2198 = vrot.lane.b32.xlu0 %v2155, 32
      %v2199 = vpop.permute.xlu0 %2198
      %2200 = vrot.lane.b32.xlu0 %v2156, 32
      %v2201 = vpop.permute.xlu0 %2200
      %2202 = vrot.lane.b32.xlu0 %v2157, 32
      %v2203 = vpop.permute.xlu0 %2202
      %2204 = vrot.lane.b32.xlu0 %v2158, 32
      %v2205 = vpop.permute.xlu0 %2204
      %2206 = vrot.lane.b32.xlu0 %v2159, 32
      %v2207 = vpop.permute.xlu0 %2206
      %v2224 = vsel %vm864, %v1518, %v2177
      %v2225 = vsel %vm864, %v1519, %v2179
      %v2226 = vsel %vm864, %v1520, %v2181
      %v2227 = vsel %vm864, %v1521, %v2183
      %v2228 = vsel %vm864, %v1522, %v2185
      %v2229 = vsel %vm864, %v1523, %v2187
      %v2230 = vsel %vm864, %v1524, %v2189
      %v2231 = vsel %vm864, %v1525, %v2191
      %v2232 = vsel %vm864, %v1526, %v2193
      %v2233 = vsel %vm864, %v1527, %v2195
      %v2234 = vsel %vm864, %v1528, %v2197
      %v2235 = vsel %vm864, %v1529, %v2199
      %v2236 = vsel %vm864, %v1530, %v2201
      %v2237 = vsel %vm864, %v1531, %v2203
      %v2238 = vsel %vm864, %v1532, %v2205
      %v2239 = vsel %vm864, %v1533, %v2207
      %v2240 = vld [vmem:[%s10] sm:$0xff]
      %v2241 = vld [vmem:[%s10 + $0x8] sm:$0xff]
      %v2242 = vld [vmem:[%s10 + $0x10] sm:$0xff]
      %v2243 = vld [vmem:[%s10 + $0x18] sm:$0xff]
      %v2244 = vld [vmem:[%s10 + $0x20] sm:$0xff]
      %v2245 = vld [vmem:[%s10 + $0x28] sm:$0xff]
      %v2246 = vld [vmem:[%s10 + $0x30] sm:$0xff]
      %v2247 = vld [vmem:[%s10 + $0x38] sm:$0xff]
      %v2248 = vld [vmem:[%s11] sm:$0x1]
      %v2250 = vperm.slane %v2248, 0
      %vm2252 = vcmask 523264
      %v2254 = vsel %vm2252, %v2224, 0
      %v2257 = vsel %vm2252, %v2225, 0
      %v2260 = vsel %vm2252, %v2226, 0
      %v2263 = vsel %vm2252, %v2227, 0
      %v2266 = vsel %vm2252, %v2228, 0
      %v2269 = vsel %vm2252, %v2229, 0
      %v2272 = vsel %vm2252, %v2230, 0
      %v2275 = vsel %vm2252, %v2231, 0
      %v2278 = vsel %vm2252, %v2232, 0
      %v2281 = vsel %vm2252, %v2233, 0
      %v2284 = vsel %vm2252, %v2234, 0
      %v2287 = vsel %vm2252, %v2235, 0
      %v2290 = vsel %vm2252, %v2236, 0
      %v2293 = vsel %vm2252, %v2237, 0
      %v2296 = vsel %vm2252, %v2238, 0
      %v2299 = vsel %vm2252, %v2239, 0
      %2301 = vmatpush.msra.mxu0 0.0
      %2302 = vmatpush.msra.mxu0 0.0
      %2303 = vmatpush.msra.mxu0 0.0
      %2304 = vmatpush.msra.mxu0 0.0
      %2305 = vmatpush.msra.mxu0 0.0
      %2306 = vmatpush.msra.mxu0 0.0
      %2307 = vmatpush.msra.mxu0 0.0
      %2308 = vmatpush.msra.mxu0 0.0
      %2309 = vmatpush.msra.mxu0 %v2247
      %2310 = vmatpush.msra.mxu0 %v2246
      %2311 = vmatpush.msra.mxu0 %v2245
      %2312 = vmatpush.msra.mxu0 %v2244
      %2313 = vmatpush.msra.mxu0 %v2243
      %2314 = vmatpush.msra.mxu0 %v2242
      %2315 = vmatpush.msra.mxu0 %v2241
      %2316 = vmatpush.msra.mxu0 %v2240
      %2317 = vmatmul.f32.gmra.mxu0 %v2254
      %v2318 = vpop.f32.mrf.mxu0
      %v2319 = vadd.f32 %v2250, %v2318
      %2320 = vmatmul.f32.gmra.mxu0 %v2257
      %v2321 = vpop.f32.mrf.mxu0
      %v2322 = vadd.f32 %v2250, %v2321
      %2323 = vmatmul.f32.gmra.mxu0 %v2260
      %v2324 = vpop.f32.mrf.mxu0
      %v2325 = vadd.f32 %v2250, %v2324
      %2326 = vmatmul.f32.gmra.mxu0 %v2263
      %v2327 = vpop.f32.mrf.mxu0
      %v2328 = vadd.f32 %v2250, %v2327
      %2329 = vmatmul.f32.gmra.mxu0 %v2266
      %v2330 = vpop.f32.mrf.mxu0
      %v2331 = vadd.f32 %v2250, %v2330
      %2332 = vmatmul.f32.gmra.mxu0 %v2269
      %v2333 = vpop.f32.mrf.mxu0
      %v2334 = vadd.f32 %v2250, %v2333
      %2335 = vmatmul.f32.gmra.mxu0 %v2272
      %v2336 = vpop.f32.mrf.mxu0
      %v2337 = vadd.f32 %v2250, %v2336
      %2338 = vmatmul.f32.gmra.mxu0 %v2275
      %v2339 = vpop.f32.mrf.mxu0
      %v2340 = vadd.f32 %v2250, %v2339
      %2341 = vmatmul.f32.gmra.mxu0 %v2278
      %v2342 = vpop.f32.mrf.mxu0
      %v2343 = vadd.f32 %v2250, %v2342
      %2344 = vmatmul.f32.gmra.mxu0 %v2281
      %v2345 = vpop.f32.mrf.mxu0
      %v2346 = vadd.f32 %v2250, %v2345
      %2347 = vmatmul.f32.gmra.mxu0 %v2284
      %v2348 = vpop.f32.mrf.mxu0
      %v2349 = vadd.f32 %v2250, %v2348
      %2350 = vmatmul.f32.gmra.mxu0 %v2287
      %v2351 = vpop.f32.mrf.mxu0
      %v2352 = vadd.f32 %v2250, %v2351
      %2353 = vmatmul.f32.gmra.mxu0 %v2290
      %v2354 = vpop.f32.mrf.mxu0
      %v2355 = vadd.f32 %v2250, %v2354
      %2356 = vmatmul.f32.gmra.mxu0 %v2293
      %v2357 = vpop.f32.mrf.mxu0
      %v2358 = vadd.f32 %v2250, %v2357
      %2359 = vmatmul.f32.gmra.mxu0 %v2296
      %v2360 = vpop.f32.mrf.mxu0
      %v2361 = vadd.f32 %v2250, %v2360
      %2362 = vmatmul.f32.gmra.mxu0 %v2299
      %v2363 = vpop.f32.mrf.mxu0
      %v2364 = vadd.f32 %v2250, %v2363
      %2365 = vdwg.mxu0
      %v2366 = vld [vmem:[%s12] sm:$0xff]
      %v2367 = vld [vmem:[%s12 + $0x8] sm:$0xff]
      %v2368 = vld [vmem:[%s12 + $0x10] sm:$0xff]
      %v2369 = vld [vmem:[%s12 + $0x18] sm:$0xff]
      %v2370 = vld [vmem:[%s13] sm:$0x1]
      %v2372 = vperm.slane %v2370, 0
      %v2375 = vsel %vm864, %v2319, 0
      %v2378 = vsel %vm864, %v2322, 0
      %v2381 = vsel %vm864, %v2325, 0
      %v2384 = vsel %vm864, %v2328, 0
      %v2387 = vsel %vm864, %v2331, 0
      %v2390 = vsel %vm864, %v2334, 0
      %v2393 = vsel %vm864, %v2337, 0
      %v2396 = vsel %vm864, %v2340, 0
      %v2399 = vsel %vm864, %v2343, 0
      %v2402 = vsel %vm864, %v2346, 0
      %v2405 = vsel %vm864, %v2349, 0
      %v2408 = vsel %vm864, %v2352, 0
      %v2411 = vsel %vm864, %v2355, 0
      %v2414 = vsel %vm864, %v2358, 0
      %v2417 = vsel %vm864, %v2361, 0
      %v2420 = vsel %vm864, %v2364, 0
      %2422 = vmatpush.msra.mxu0 0.0
      %2423 = vmatpush.msra.mxu0 0.0
      %2424 = vmatpush.msra.mxu0 0.0
      %2425 = vmatpush.msra.mxu0 0.0
      %2426 = vmatpush.msra.mxu0 0.0
      %2427 = vmatpush.msra.mxu0 0.0
      %2428 = vmatpush.msra.mxu0 0.0
      %2429 = vmatpush.msra.mxu0 0.0
      %2430 = vmatpush.msra.mxu0 0.0
      %2431 = vmatpush.msra.mxu0 0.0
      %2432 = vmatpush.msra.mxu0 0.0
      %2433 = vmatpush.msra.mxu0 0.0
      %2434 = vmatpush.msra.mxu0 %v2369
      %2435 = vmatpush.msra.mxu0 %v2368
      %2436 = vmatpush.msra.mxu0 %v2367
      %2437 = vmatpush.msra.mxu0 %v2366
      %2438 = vmatmul.f32.gmra.mxu0 %v2375
      %v2439 = vpop.f32.mrf.mxu0
      %v2440 = vadd.f32 %v2372, %v2439
      %2441 = vmatmul.f32.gmra.mxu0 %v2378
      %v2442 = vpop.f32.mrf.mxu0
      %v2443 = vadd.f32 %v2372, %v2442
      %2444 = vmatmul.f32.gmra.mxu0 %v2381
      %v2445 = vpop.f32.mrf.mxu0
      %v2446 = vadd.f32 %v2372, %v2445
      %2447 = vmatmul.f32.gmra.mxu0 %v2384
      %v2448 = vpop.f32.mrf.mxu0
      %v2449 = vadd.f32 %v2372, %v2448
      %2450 = vmatmul.f32.gmra.mxu0 %v2387
      %v2451 = vpop.f32.mrf.mxu0
      %v2452 = vadd.f32 %v2372, %v2451
      %2453 = vmatmul.f32.gmra.mxu0 %v2390
      %v2454 = vpop.f32.mrf.mxu0
      %v2455 = vadd.f32 %v2372, %v2454
      %2456 = vmatmul.f32.gmra.mxu0 %v2393
      %v2457 = vpop.f32.mrf.mxu0
      %v2458 = vadd.f32 %v2372, %v2457
      %2459 = vmatmul.f32.gmra.mxu0 %v2396
      %v2460 = vpop.f32.mrf.mxu0
      %v2461 = vadd.f32 %v2372, %v2460
      %2462 = vmatmul.f32.gmra.mxu0 %v2399
      %v2463 = vpop.f32.mrf.mxu0
      %v2464 = vadd.f32 %v2372, %v2463
      %2465 = vmatmul.f32.gmra.mxu0 %v2402
      %v2466 = vpop.f32.mrf.mxu0
      %v2467 = vadd.f32 %v2372, %v2466
      %2468 = vmatmul.f32.gmra.mxu0 %v2405
      %v2469 = vpop.f32.mrf.mxu0
      %v2470 = vadd.f32 %v2372, %v2469
      %2471 = vmatmul.f32.gmra.mxu0 %v2408
      %v2472 = vpop.f32.mrf.mxu0
      %v2473 = vadd.f32 %v2372, %v2472
      %2474 = vmatmul.f32.gmra.mxu0 %v2411
      %v2475 = vpop.f32.mrf.mxu0
      %v2476 = vadd.f32 %v2372, %v2475
      %2477 = vmatmul.f32.gmra.mxu0 %v2414
      %v2478 = vpop.f32.mrf.mxu0
      %v2479 = vadd.f32 %v2372, %v2478
      %2480 = vmatmul.f32.gmra.mxu0 %v2417
      %v2481 = vpop.f32.mrf.mxu0
      %v2482 = vadd.f32 %v2372, %v2481
      %2483 = vmatmul.f32.gmra.mxu0 %v2420
      %v2484 = vpop.f32.mrf.mxu0
      %v2485 = vadd.f32 %v2372, %v2484
      %2486 = vdwg.mxu0
      %v2487 = vmax.f32 %v2440, 0.0
      %v2488 = vmax.f32 %v2443, 0.0
      %v2489 = vmax.f32 %v2446, 0.0
      %v2490 = vmax.f32 %v2449, 0.0
      %v2491 = vmax.f32 %v2452, 0.0
      %v2492 = vmax.f32 %v2455, 0.0
      %v2493 = vmax.f32 %v2458, 0.0
      %v2494 = vmax.f32 %v2461, 0.0
      %v2495 = vmax.f32 %v2464, 0.0
      %v2496 = vmax.f32 %v2467, 0.0
      %v2497 = vmax.f32 %v2470, 0.0
      %v2498 = vmax.f32 %v2473, 0.0
      %v2499 = vmax.f32 %v2476, 0.0
      %v2500 = vmax.f32 %v2479, 0.0
      %v2501 = vmax.f32 %v2482, 0.0
      %v2502 = vmax.f32 %v2485, 0.0
      %v2503 = vld [vmem:[%s14] sm:$0x1]
      %v2505 = vperm.slane %v2503, 0
      %v2507 = vmul.f32 %v2487, %v2505
      %v2508 = vmul.f32 %v2488, %v2505
      %v2509 = vmul.f32 %v2489, %v2505
      %v2510 = vmul.f32 %v2490, %v2505
      %v2511 = vmul.f32 %v2491, %v2505
      %v2512 = vmul.f32 %v2492, %v2505
      %v2513 = vmul.f32 %v2493, %v2505
      %v2514 = vmul.f32 %v2494, %v2505
      %v2515 = vmul.f32 %v2495, %v2505
      %v2516 = vmul.f32 %v2496, %v2505
      %v2517 = vmul.f32 %v2497, %v2505
      %v2518 = vmul.f32 %v2498, %v2505
      %v2519 = vmul.f32 %v2499, %v2505
      %v2520 = vmul.f32 %v2500, %v2505
      %v2521 = vmul.f32 %v2501, %v2505
      %v2522 = vmul.f32 %v2502, %v2505
      %v2523 = vsel %vm746, %v2507, 0.0
      %2524 = vadd.xlane.f32.xlu0 %v2523
      %v2525 = vpop.xlane.xlu0 %2524
      %v2526 = vsel %vm746, %v2508, 0.0
      %2527 = vadd.xlane.f32.xlu0 %v2526
      %v2528 = vpop.xlane.xlu0 %2527
      %v2529 = vsel %vm746, %v2509, 0.0
      %2530 = vadd.xlane.f32.xlu0 %v2529
      %v2531 = vpop.xlane.xlu0 %2530
      %v2532 = vsel %vm746, %v2510, 0.0
      %2533 = vadd.xlane.f32.xlu0 %v2532
      %v2534 = vpop.xlane.xlu0 %2533
      %v2535 = vsel %vm746, %v2511, 0.0
      %2536 = vadd.xlane.f32.xlu0 %v2535
      %v2537 = vpop.xlane.xlu0 %2536
      %v2538 = vsel %vm746, %v2512, 0.0
      %2539 = vadd.xlane.f32.xlu0 %v2538
      %v2540 = vpop.xlane.xlu0 %2539
      %v2541 = vsel %vm746, %v2513, 0.0
      %2542 = vadd.xlane.f32.xlu0 %v2541
      %v2543 = vpop.xlane.xlu0 %2542
      %v2544 = vsel %vm746, %v2514, 0.0
      %2545 = vadd.xlane.f32.xlu0 %v2544
      %v2546 = vpop.xlane.xlu0 %2545
      %v2547 = vsel %vm746, %v2515, 0.0
      %2548 = vadd.xlane.f32.xlu0 %v2547
      %v2549 = vpop.xlane.xlu0 %2548
      %v2550 = vsel %vm746, %v2516, 0.0
      %2551 = vadd.xlane.f32.xlu0 %v2550
      %v2552 = vpop.xlane.xlu0 %2551
      %v2553 = vsel %vm746, %v2517, 0.0
      %2554 = vadd.xlane.f32.xlu0 %v2553
      %v2555 = vpop.xlane.xlu0 %2554
      %v2556 = vsel %vm746, %v2518, 0.0
      %2557 = vadd.xlane.f32.xlu0 %v2556
      %v2558 = vpop.xlane.xlu0 %2557
      %v2559 = vsel %vm746, %v2519, 0.0
      %2560 = vadd.xlane.f32.xlu0 %v2559
      %v2561 = vpop.xlane.xlu0 %2560
      %v2562 = vsel %vm746, %v2520, 0.0
      %2563 = vadd.xlane.f32.xlu0 %v2562
      %v2564 = vpop.xlane.xlu0 %2563
      %v2565 = vsel %vm746, %v2521, 0.0
      %2566 = vadd.xlane.f32.xlu0 %v2565
      %v2567 = vpop.xlane.xlu0 %2566
      %v2568 = vsel %vm746, %v2522, 0.0
      %2569 = vadd.xlane.f32.xlu0 %v2568
      %v2570 = vpop.xlane.xlu0 %2569
      %v2571 = vld [vmem:[#allocation2] sm:$0x1]
      %v2573 = vperm.slane %v2571, 0
      %v2575 = vadd.f32 %v2525, %v2573
      %v2576 = vadd.f32 %v2528, %v2573
      %v2577 = vadd.f32 %v2531, %v2573
      %v2578 = vadd.f32 %v2534, %v2573
      %v2579 = vadd.f32 %v2537, %v2573
      %v2580 = vadd.f32 %v2540, %v2573
      %v2581 = vadd.f32 %v2543, %v2573
      %v2582 = vadd.f32 %v2546, %v2573
      %v2583 = vadd.f32 %v2549, %v2573
      %v2584 = vadd.f32 %v2552, %v2573
      %v2585 = vadd.f32 %v2555, %v2573
      %v2586 = vadd.f32 %v2558, %v2573
      %v2587 = vadd.f32 %v2561, %v2573
      %v2588 = vadd.f32 %v2564, %v2573
      %v2589 = vadd.f32 %v2567, %v2573
      %v2590 = vadd.f32 %v2570, %v2573
      %v2591 = vld [vmem:[%s686] sm:$0xff]
      %v2592 = vld [vmem:[%s686 + $0x8] sm:$0xff]
      %v2593 = vld [vmem:[%s686 + $0x10] sm:$0xff]
      %v2594 = vld [vmem:[%s686 + $0x18] sm:$0xff]
      %v2595 = vld [vmem:[%s686 + $0x20] sm:$0xff]
      %v2596 = vld [vmem:[%s686 + $0x28] sm:$0xff]
      %v2597 = vld [vmem:[%s686 + $0x30] sm:$0xff]
      %v2598 = vld [vmem:[%s686 + $0x38] sm:$0xff]
      %v2599 = vld [vmem:[%s686 + $0x40] sm:$0xff]
      %v2600 = vld [vmem:[%s686 + $0x48] sm:$0xff]
      %v2601 = vld [vmem:[%s686 + $0x50] sm:$0xff]
      %v2602 = vld [vmem:[%s686 + $0x58] sm:$0xff]
      %v2603 = vld [vmem:[%s686 + $0x60] sm:$0xff]
      %v2604 = vld [vmem:[%s686 + $0x68] sm:$0xff]
      %v2605 = vld [vmem:[%s686 + $0x70] sm:$0xff]
      %v2606 = vld [vmem:[%s686 + $0x78] sm:$0xff]
      %vm2607 = vcmp.gt.f32.partialorder %v2591, 0.5
      %vm2608 = vcmp.gt.f32.partialorder %v2592, 0.5
      %vm2609 = vcmp.gt.f32.partialorder %v2593, 0.5
      %vm2610 = vcmp.gt.f32.partialorder %v2594, 0.5
      %vm2611 = vcmp.gt.f32.partialorder %v2595, 0.5
      %vm2612 = vcmp.gt.f32.partialorder %v2596, 0.5
      %vm2613 = vcmp.gt.f32.partialorder %v2597, 0.5
      %vm2614 = vcmp.gt.f32.partialorder %v2598, 0.5
      %vm2615 = vcmp.gt.f32.partialorder %v2599, 0.5
      %vm2616 = vcmp.gt.f32.partialorder %v2600, 0.5
      %vm2617 = vcmp.gt.f32.partialorder %v2601, 0.5
      %vm2618 = vcmp.gt.f32.partialorder %v2602, 0.5
      %vm2619 = vcmp.gt.f32.partialorder %v2603, 0.5
      %vm2620 = vcmp.gt.f32.partialorder %v2604, 0.5
      %vm2621 = vcmp.gt.f32.partialorder %v2605, 0.5
      %vm2622 = vcmp.gt.f32.partialorder %v2606, 0.5
      %v2623 = vsel %vm2607, %v2575, -10.0
      %v2624 = vsel %vm2608, %v2576, -10.0
      %v2625 = vsel %vm2609, %v2577, -10.0
      %v2626 = vsel %vm2610, %v2578, -10.0
      %v2627 = vsel %vm2611, %v2579, -10.0
      %v2628 = vsel %vm2612, %v2580, -10.0
      %v2629 = vsel %vm2613, %v2581, -10.0
      %v2630 = vsel %vm2614, %v2582, -10.0
      %v2631 = vsel %vm2615, %v2583, -10.0
      %v2632 = vsel %vm2616, %v2584, -10.0
      %v2633 = vsel %vm2617, %v2585, -10.0
      %v2634 = vsel %vm2618, %v2586, -10.0
      %v2635 = vsel %vm2619, %v2587, -10.0
      %v2636 = vsel %vm2620, %v2588, -10.0
      %v2637 = vsel %vm2621, %v2589, -10.0
      %v2638 = vsel %vm2622, %v2590, -10.0
      %v2639 = vld [vmem:[%s4] sm:$0xff]
      %v2640 = vld [vmem:[%s4 + $0x8] sm:$0xff]
      %v2641 = vld [vmem:[%s16] sm:$0xff]
      %v2642 = vld [vmem:[%s16 + $0x8] sm:$0xff]
      %v2643 = vld [vmem:[%s16 + $0x10] sm:$0xff]
      %v2644 = vld [vmem:[%s16 + $0x18] sm:$0xff]
      %v2645 = vld [vmem:[%s16 + $0x20] sm:$0xff]
      %v2646 = vld [vmem:[%s16 + $0x28] sm:$0xff]
      %v2647 = vld [vmem:[%s16 + $0x30] sm:$0xff]
      %v2648 = vld [vmem:[%s16 + $0x38] sm:$0xff]
      %v2649 = vld [vmem:[%s16 + $0x40] sm:$0xff]
      %v2650 = vld [vmem:[%s16 + $0x48] sm:$0xff]
      %v2651 = vld [vmem:[%s16 + $0x50] sm:$0xff]
      %v2652 = vld [vmem:[%s16 + $0x58] sm:$0xff]
      %v2653 = vld [vmem:[%s16 + $0x60] sm:$0xff]
      %v2654 = vld [vmem:[%s16 + $0x68] sm:$0xff]
      %v2655 = vld [vmem:[%s16 + $0x70] sm:$0xff]
      %v2656 = vld [vmem:[%s16 + $0x78] sm:$0xff]
      %2658 = vset.pattern.permute.xlu0 0
      %2659 = vperm.xlu0 %2658, %v2623
      %v2660 = vpop.permute.xlu0 %2659
      %2663 = vset.pattern.permute.xlu0 0
      %2664 = vperm.xlu0 %2663, %v2624
      %v2665 = vpop.permute.xlu0 %2664
      %2668 = vset.pattern.permute.xlu0 0
      %2669 = vperm.xlu0 %2668, %v2625
      %v2670 = vpop.permute.xlu0 %2669
      %2673 = vset.pattern.permute.xlu0 0
      %2674 = vperm.xlu0 %2673, %v2626
      %v2675 = vpop.permute.xlu0 %2674
      %2678 = vset.pattern.permute.xlu0 0
      %2679 = vperm.xlu0 %2678, %v2627
      %v2680 = vpop.permute.xlu0 %2679
      %2683 = vset.pattern.permute.xlu0 0
      %2684 = vperm.xlu0 %2683, %v2628
      %v2685 = vpop.permute.xlu0 %2684
      %2688 = vset.pattern.permute.xlu0 0
      %2689 = vperm.xlu0 %2688, %v2629
      %v2690 = vpop.permute.xlu0 %2689
      %2693 = vset.pattern.permute.xlu0 0
      %2694 = vperm.xlu0 %2693, %v2630
      %v2695 = vpop.permute.xlu0 %2694
      %2698 = vset.pattern.permute.xlu0 0
      %2699 = vperm.xlu0 %2698, %v2631
      %v2700 = vpop.permute.xlu0 %2699
      %2703 = vset.pattern.permute.xlu0 0
      %2704 = vperm.xlu0 %2703, %v2632
      %v2705 = vpop.permute.xlu0 %2704
      %2708 = vset.pattern.permute.xlu0 0
      %2709 = vperm.xlu0 %2708, %v2633
      %v2710 = vpop.permute.xlu0 %2709
      %2713 = vset.pattern.permute.xlu0 0
      %2714 = vperm.xlu0 %2713, %v2634
      %v2715 = vpop.permute.xlu0 %2714
      %2718 = vset.pattern.permute.xlu0 0
      %2719 = vperm.xlu0 %2718, %v2635
      %v2720 = vpop.permute.xlu0 %2719
      %2723 = vset.pattern.permute.xlu0 0
      %2724 = vperm.xlu0 %2723, %v2636
      %v2725 = vpop.permute.xlu0 %2724
      %2728 = vset.pattern.permute.xlu0 0
      %2729 = vperm.xlu0 %2728, %v2637
      %v2730 = vpop.permute.xlu0 %2729
      %2733 = vset.pattern.permute.xlu0 0
      %2734 = vperm.xlu0 %2733, %v2638
      %v2735 = vpop.permute.xlu0 %2734
      %v2737 = vmul.f32 %v2660, %v2641
      %v2738 = vmul.f32 %v2665, %v2642
      %v2739 = vmul.f32 %v2670, %v2643
      %v2740 = vmul.f32 %v2675, %v2644
      %v2741 = vmul.f32 %v2680, %v2645
      %v2742 = vmul.f32 %v2685, %v2646
      %v2743 = vmul.f32 %v2690, %v2647
      %v2744 = vmul.f32 %v2695, %v2648
      %v2745 = vmul.f32 %v2700, %v2649
      %v2746 = vmul.f32 %v2705, %v2650
      %v2747 = vmul.f32 %v2710, %v2651
      %v2748 = vmul.f32 %v2715, %v2652
      %v2749 = vmul.f32 %v2720, %v2653
      %v2750 = vmul.f32 %v2725, %v2654
      %v2751 = vmul.f32 %v2730, %v2655
      %v2752 = vmul.f32 %v2735, %v2656
      %v2753 = vld [vmem:[%s17] sm:$0x1]
      %v2755 = vperm.slane %v2753, 0
      %2757 = vmatpush.msra.mxu0 %v2752
      %2758 = vmatpush.msra.mxu0 %v2751
      %2759 = vmatpush.msra.mxu0 %v2750
      %2760 = vmatpush.msra.mxu0 %v2749
      %2761 = vmatpush.msra.mxu0 %v2748
      %2762 = vmatpush.msra.mxu0 %v2747
      %2763 = vmatpush.msra.mxu0 %v2746
      %2764 = vmatpush.msra.mxu0 %v2745
      %2765 = vmatpush.msra.mxu0 %v2744
      %2766 = vmatpush.msra.mxu0 %v2743
      %2767 = vmatpush.msra.mxu0 %v2742
      %2768 = vmatpush.msra.mxu0 %v2741
      %2769 = vmatpush.msra.mxu0 %v2740
      %2770 = vmatpush.msra.mxu0 %v2739
      %2771 = vmatpush.msra.mxu0 %v2738
      %2772 = vmatpush.msra.mxu0 %v2737
      %2773 = vmatmul.f32.gmra.mxu0 %v2639
      %v2774 = vpop.f32.mrf.mxu0
      %v2775 = vadd.f32 %v2755, %v2774
      %2776 = vmatmul.f32.gmra.mxu0 %v2640
      %v2777 = vpop.f32.mrf.mxu0
      %v2778 = vadd.f32 %v2755, %v2777
      %2779 = vdwg.mxu0
      %v2780 = vmax.f32 %v2775, 0.0
      %v2781 = vmax.f32 %v2778, 0.0
      %v2782 = vld [vmem:[%s18] sm:$0xff]
      %v2783 = vld [vmem:[%s18 + $0x8] sm:$0xff]
      %v2784 = vld [vmem:[%s19] sm:$0x1]
      %v2786 = vperm.slane %v2784, 0
      %v2789 = vsel %vm746, %v2780, 0
      %v2792 = vsel %vm746, %v2781, 0
      %2794 = vmatpush.msra.mxu0 0.0
      %2795 = vmatpush.msra.mxu0 0.0
      %2796 = vmatpush.msra.mxu0 0.0
      %2797 = vmatpush.msra.mxu0 0.0
      %2798 = vmatpush.msra.mxu0 0.0
      %2799 = vmatpush.msra.mxu0 0.0
      %2800 = vmatpush.msra.mxu0 0.0
      %2801 = vmatpush.msra.mxu0 0.0
      %2802 = vmatpush.msra.mxu0 0.0
      %2803 = vmatpush.msra.mxu0 0.0
      %2804 = vmatpush.msra.mxu0 0.0
      %2805 = vmatpush.msra.mxu0 0.0
      %2806 = vmatpush.msra.mxu0 0.0
      %2807 = vmatpush.msra.mxu0 0.0
      %2808 = vmatpush.msra.mxu0 %v2783
      %2809 = vmatpush.msra.mxu0 %v2782
      %2810 = vmatmul.f32.gmra.mxu0 %v2789
      %v2811 = vpop.f32.mrf.mxu0
      %v2812 = vadd.f32 %v2786, %v2811
      %2813 = vmatmul.f32.gmra.mxu0 %v2792
      %v2814 = vpop.f32.mrf.mxu0
      %v2815 = vadd.f32 %v2786, %v2814
      %2816 = vdwg.mxu0
      %vm2817 = vcmask 64512
      %2818 = vst.msk [vmem:[%s691] sm:$0xff] %vm2817, %v2812
      %2819 = vst.msk [vmem:[%s691 + $0x8] sm:$0xff] %vm2817, %v2815
      %p2820 = scmp.lt.s32.totalorder %s33, 1
      %s2821 = scalar_select %p2820, %s33, 1
      %s2822 = smul.addr %s2821, 2
      %s2823 = smul.addr %s2822, 8
      %s2824 = scalar_lea.vmem %s20, %s2823
      // Predicated region
      $region101: #{tpu_custom_call.1} parent=99 // pred_check
        %p2825 = pneg %p491
      $region102: #{tpu_custom_call.1} parent=99 // pred_check_branch
        %2827 = sbr.rel (%p2825) target = $region104
      $region103: #{tpu_custom_call.1} parent=99 // pred_region
        _
      $region104: #{tpu_custom_call.1} parent=99 // pred_fallthru
        _
    $region100: #{tpu_custom_call.1} parent=5 // pred_fallthru
      _
    %p2828 = scmp.le.s32.totalorder 2, %s28
    // Predicated region
    $region105: #{tpu_custom_call.1} parent=5 // pred_check
      %p2829 = pneg %p2828
    $region106: #{tpu_custom_call.1} parent=5 // pred_check_branch
      %2831 = sbr.rel (%p2829) target = $region108
    $region107: #{tpu_custom_call.1} parent=5 // pred_region
      %s2832 = ssub.s32 %s28, 2
      // Predicated region
      $region109: #{tpu_custom_call.1} parent=107 // pred_check
        %p2833 = pneg %p497
      $region110: #{tpu_custom_call.1} parent=107 // pred_check_branch
        %2835 = sbr.rel (%p2833) target = $region112
      $region111: #{tpu_custom_call.1} parent=107 // pred_region
        %p2836 = scmp.lt.s32.totalorder %s34, 1
        %s2837 = scalar_select %p2836, %s34, 1
        %s2838 = smul.addr %s2837, 2
        %s2839 = smul.addr %s2838, 8
        %s2840 = scalar_lea.vmem %s20, %s2839
      $region112: #{tpu_custom_call.1} parent=107 // pred_fallthru
        _
    $region108: #{tpu_custom_call.1} parent=5 // pred_fallthru
      _
  $region6: #{tpu_custom_call.1} parent=0 // loop_footer
    %s32 = sadd.s32 1, %s28
  $region7: #{tpu_custom_call.1} parent=0 // loop_footer_branch
    %27 = sbr.rel target = $region3
  $region8: #{tpu_custom_call.1} parent=0 // loop_exit
    _

</llo_original>
